<compile_context>
chip_gen: v7x
topology: tpu7x:2x2x1
jax: 0.10.0
libtpu: 0.0.40
codegen_flags: <defaults>
</compile_context>

<pallas_src>
import jax
import jax.numpy as jnp
from jax.experimental import pallas as pl
from jax.experimental.pallas import tpu as pltpu


def _leaky_relu(v, negative_slope=0.01):
    # torch.nn.functional.leaky_relu with slope in (0,1): one mul + max.
    return jnp.maximum(v, negative_slope * v)


def _round_up(n, m):
    return ((n + m - 1) // m) * m


def qnet_kernel(x_ref, w1_ref, b1_ref, w2_ref, b2_ref,
                w3_ref, b3_ref, w4_ref, b4_ref, o_ref):
    """Fused 4-layer MLP forward for one (tile, n_input) batch tile."""
    cd = w1_ref.dtype  # MXU operand dtype (bf16 by default)
    # In-kernel cast of the input (few VPU ops, hidden under DMA slack).
    h = x_ref[...].astype(cd)
    # dot -> f32 accumulator; bias + activation in f32; cast back for next MXU pass.
    h = _leaky_relu(jnp.dot(h, w1_ref[...], preferred_element_type=jnp.float32)
                    + b1_ref[...]).astype(cd)
    h = _leaky_relu(jnp.dot(h, w2_ref[...], preferred_element_type=jnp.float32)
                    + b2_ref[...]).astype(cd)
    h = _leaky_relu(jnp.dot(h, w3_ref[...], preferred_element_type=jnp.float32)
                    + b3_ref[...]).astype(cd)
    out = jnp.dot(h, w4_ref[...], preferred_element_type=jnp.float32) + b4_ref[...]
    o_ref[...] = out.astype(o_ref.dtype)


def qnetwork_forward(x, params, *, batch_tile=1024, compute_dtype=jnp.bfloat16,
                     min_grid=2):
    """x: (B, n_input) float. params: w1..w4 (in,out), b1..b4 (1,out).

    min_grid=2 keeps both v7x TensorCores busy when batches are large enough;
    it never shrinks tiles below 512 rows, so on v5e/v6e the cost is at most
    one extra ~0.35us grid step.
    """
    B, n_input = x.shape
    n_output = params["w4"].shape[1]
    out_dtype = x.dtype

    # --- dtype staging: bf16 matmul operands, f32 biases (all tiny & resident)
    cd = compute_dtype
    w1 = params["w1"].astype(cd)
    w2 = params["w2"].astype(cd)
    w3 = params["w3"].astype(cd)
    w4 = params["w4"].astype(cd)
    b1 = params["b1"].astype(jnp.float32)
    b2 = params["b2"].astype(jnp.float32)
    b3 = params["b3"].astype(jnp.float32)
    b4 = params["b4"].astype(jnp.float32)

    # --- batch tiling ---------------------------------------------------------
    # Sublane-aligned tile, as large as useful; ragged tails handled by Pallas
    # boundary masking (no wrapper-side pad / slice of x or the output).
    rounded_b = _round_up(B, 8)
    tile = min(_round_up(batch_tile, 8), rounded_b)
    if min_grid > 1:
        cap = _round_up(pl.cdiv(rounded_b, min_grid), 8)
        if cap >= 512:          # only split when per-core tiles stay DMA-efficient
            tile = min(tile, cap)
    grid = pl.cdiv(B, tile)

    # Weights/biases: full-array blocks with constant index maps -> resident
    # in VMEM across all grid steps (default memory space is VMEM).
    def full(arr):
        return pl.BlockSpec(arr.shape, lambda i: (0, 0))

    out = pl.pallas_call(
        qnet_kernel,
        out_shape=jax.ShapeDtypeStruct((B, n_output), out_dtype),
        grid_spec=pl.GridSpec(
            grid=(grid,),
            in_specs=[
                pl.BlockSpec((tile, n_input), lambda i: (i, 0)),
                full(w1), full(b1),
                full(w2), full(b2),
                full(w3), full(b3),
                full(w4), full(b4),
            ],
            # Unpadded, last dim == full array dim -> no write inflation.
            out_specs=pl.BlockSpec((tile, n_output), lambda i: (i, 0)),
        ),
        compiler_params=pltpu.CompilerParams(
            dimension_semantics=("parallel",)),
    )(x, w1, b1, w2, b2, w3, b3, w4, b4)

    return out


def init_params(key, n_input, n_hidden, n_output, dtype=jnp.float32):
    """Mimics nn.Linear init U(-1/sqrt(fan_in), 1/sqrt(fan_in)).
    Weights stored transposed: (in_features, out_features)."""
    dims = [(n_input, n_hidden), (n_hidden, n_hidden),
            (n_hidden, n_hidden), (n_hidden, n_output)]
    params = {}
    for idx, (fan_in, fan_out) in enumerate(dims, start=1):
        key, kw, kb = jax.random.split(key, 3)
        bound = 1.0 / (fan_in ** 0.5)
        params[f"w{idx}"] = jax.random.uniform(
            kw, (fan_in, fan_out), dtype, minval=-bound, maxval=bound)
        params[f"b{idx}"] = jax.random.uniform(
            kb, (1, fan_out), dtype, minval=-bound, maxval=bound)
    return params


def qnetwork_reference(x, params, compute_dtype=jnp.float32):
    """Pure-JAX reference; compute_dtype mirrors the kernel's operand dtype."""
    cd = compute_dtype
    h = x.astype(cd)
    for idx in (1, 2, 3):
        h = _leaky_relu(
            jnp.dot(h, params[f"w{idx}"].astype(cd),
                    preferred_element_type=jnp.float32)
            + params[f"b{idx}"].astype(jnp.float32)).astype(cd)
    out = (jnp.dot(h, params["w4"].astype(cd), preferred_element_type=jnp.float32)
           + params["b4"].astype(jnp.float32))
    return out.astype(x.dtype)


if __name__ == "__main__":
    key = jax.random.PRNGKey(0)
    n_input, n_hidden, n_output = 16, 32, 8

    kx, kp = jax.random.split(key)
    params = init_params(kp, n_input, n_hidden, n_output)

    def check(x, out, atol_bf16=1e-3, atol_f32=1e-1):
        ref_bf16 = qnetwork_reference(x, params, compute_dtype=jnp.bfloat16)
        ref_f32 = qnetwork_reference(x, params, compute_dtype=jnp.float32)
        assert out.shape == (x.shape[0], n_output)
        assert jnp.allclose(out, ref_bf16, atol=atol_bf16, rtol=1e-3), \
            "mismatch vs same-precision (bf16) reference"
        assert jnp.allclose(out, ref_f32, atol=atol_f32, rtol=1e-1), \
            "mismatch vs f32 reference beyond bf16 tolerance"

    # Case 1: B=512 -> single large tile (no pad, no slice, unpadded output).
    x1 = jax.random.normal(kx, (512, n_input), jnp.float32)
    out1 = jax.block_until_ready(qnetwork_forward(x1, params))
    check(x1, out1)

    # Case 2: B=2048 -> tile capped at 1024 so grid=2 ("parallel" -> both v7x TCs).
    x2 = jax.random.normal(jax.random.PRNGKey(1), (2048, n_input), jnp.float32)
    out2 = jax.block_until_ready(qnetwork_forward(x2, params, batch_tile=1024))
    check(x2, out2)

    # Case 3: ragged batch with a partial tail tile (Pallas boundary masking,
    # no wrapper-side pad/slice): B=200, tile=64 -> grid=4, last block partial.
    x3 = jax.random.normal(jax.random.PRNGKey(2), (200, n_input), jnp.float32)
    out3 = jax.block_until_ready(qnetwork_forward(x3, params, batch_tile=64))
    check(x3, out3)

    print("KERNEL_OK")
</pallas_src>

<mosaic_0001>
module attributes {stable_mosaic.version = 11 : i64} {
  func.func @qnet_kernel(%arg0: i32, %arg1: memref<512x16xf32, #tpu.memory_space<vmem>>, %arg2: memref<16x32xbf16, #tpu.memory_space<vmem>>, %arg3: memref<1x32xf32, #tpu.memory_space<vmem>>, %arg4: memref<32x32xbf16, #tpu.memory_space<vmem>>, %arg5: memref<1x32xf32, #tpu.memory_space<vmem>>, %arg6: memref<32x32xbf16, #tpu.memory_space<vmem>>, %arg7: memref<1x32xf32, #tpu.memory_space<vmem>>, %arg8: memref<32x8xbf16, #tpu.memory_space<vmem>>, %arg9: memref<1x8xf32, #tpu.memory_space<vmem>>, %arg10: memref<512x8xf32, #tpu.memory_space<vmem>>) attributes {dimension_semantics = [#tpu.dimension_semantics<parallel>], iteration_bounds = array<i64: 1>, scalar_prefetch = 0 : i64, scratch_operands = 0 : i64, tpu.core_type = #tpu.core_type<tc>, window_params = [{transform_indices = @transform_0, window_bounds = array<i64: 512, 16>}, {pipeline_mode = #tpu.pipeline_mode<synchronous>, transform_indices = @transform_1, window_bounds = array<i64: 16, 32>}, {pipeline_mode = #tpu.pipeline_mode<synchronous>, transform_indices = @transform_2, window_bounds = array<i64: 1, 32>}, {pipeline_mode = #tpu.pipeline_mode<synchronous>, transform_indices = @transform_3, window_bounds = array<i64: 32, 32>}, {pipeline_mode = #tpu.pipeline_mode<synchronous>, transform_indices = @transform_4, window_bounds = array<i64: 1, 32>}, {pipeline_mode = #tpu.pipeline_mode<synchronous>, transform_indices = @transform_5, window_bounds = array<i64: 32, 32>}, {pipeline_mode = #tpu.pipeline_mode<synchronous>, transform_indices = @transform_6, window_bounds = array<i64: 1, 32>}, {pipeline_mode = #tpu.pipeline_mode<synchronous>, transform_indices = @transform_7, window_bounds = array<i64: 32, 8>}, {pipeline_mode = #tpu.pipeline_mode<synchronous>, transform_indices = @transform_8, window_bounds = array<i64: 1, 8>}, {transform_indices = @transform_9, window_bounds = array<i64: 512, 8>}]} {
    %c0 = arith.constant 0 : index
    %c0_0 = arith.constant 0 : index
    %0 = vector.load %arg1[%c0, %c0_0] : memref<512x16xf32, #tpu.memory_space<vmem>>, vector<512x16xf32>
    %1 = arith.truncf %0 : vector<512x16xf32> to vector<512x16xbf16>
    %c0_1 = arith.constant 0 : index
    %c0_2 = arith.constant 0 : index
    %2 = vector.load %arg2[%c0_1, %c0_2] : memref<16x32xbf16, #tpu.memory_space<vmem>>, vector<16x32xbf16>
    %cst = arith.constant dense<0.000000e+00> : vector<512x32xf32>
    %3 = tpu.matmul %1, %2, %cst {dimension_numbers = #tpu.dot_dimension_numbers<[1], [0], [0], [1], [0, 0, 1, 1], [], []>} : vector<512x16xbf16>, vector<16x32xbf16>, vector<512x32xf32> -> vector<512x32xf32>
    %c0_3 = arith.constant 0 : index
    %c0_4 = arith.constant 0 : index
    %4 = vector.load %arg3[%c0_3, %c0_4] : memref<1x32xf32, #tpu.memory_space<vmem>>, vector<1x32xf32>
    %5 = vector.broadcast %4 : vector<1x32xf32> to vector<512x32xf32>
    %6 = arith.addf %3, %5 : vector<512x32xf32>
    %cst_5 = arith.constant 0.00999999977 : f32
    %7 = vector.broadcast %cst_5 : f32 to vector<512x32xf32>
    %8 = arith.mulf %7, %6 : vector<512x32xf32>
    %9 = arith.maximumf %6, %8 : vector<512x32xf32>
    %10 = arith.truncf %9 : vector<512x32xf32> to vector<512x32xbf16>
    %c0_6 = arith.constant 0 : index
    %c0_7 = arith.constant 0 : index
    %11 = vector.load %arg4[%c0_6, %c0_7] : memref<32x32xbf16, #tpu.memory_space<vmem>>, vector<32x32xbf16>
    %cst_8 = arith.constant dense<0.000000e+00> : vector<512x32xf32>
    %12 = tpu.matmul %10, %11, %cst_8 {dimension_numbers = #tpu.dot_dimension_numbers<[1], [0], [0], [1], [0, 0, 1, 1], [], []>} : vector<512x32xbf16>, vector<32x32xbf16>, vector<512x32xf32> -> vector<512x32xf32>
    %c0_9 = arith.constant 0 : index
    %c0_10 = arith.constant 0 : index
    %13 = vector.load %arg5[%c0_9, %c0_10] : memref<1x32xf32, #tpu.memory_space<vmem>>, vector<1x32xf32>
    %14 = vector.broadcast %13 : vector<1x32xf32> to vector<512x32xf32>
    %15 = arith.addf %12, %14 : vector<512x32xf32>
    %cst_11 = arith.constant 0.00999999977 : f32
    %16 = vector.broadcast %cst_11 : f32 to vector<512x32xf32>
    %17 = arith.mulf %16, %15 : vector<512x32xf32>
    %18 = arith.maximumf %15, %17 : vector<512x32xf32>
    %19 = arith.truncf %18 : vector<512x32xf32> to vector<512x32xbf16>
    %c0_12 = arith.constant 0 : index
    %c0_13 = arith.constant 0 : index
    %20 = vector.load %arg6[%c0_12, %c0_13] : memref<32x32xbf16, #tpu.memory_space<vmem>>, vector<32x32xbf16>
    %cst_14 = arith.constant dense<0.000000e+00> : vector<512x32xf32>
    %21 = tpu.matmul %19, %20, %cst_14 {dimension_numbers = #tpu.dot_dimension_numbers<[1], [0], [0], [1], [0, 0, 1, 1], [], []>} : vector<512x32xbf16>, vector<32x32xbf16>, vector<512x32xf32> -> vector<512x32xf32>
    %c0_15 = arith.constant 0 : index
    %c0_16 = arith.constant 0 : index
    %22 = vector.load %arg7[%c0_15, %c0_16] : memref<1x32xf32, #tpu.memory_space<vmem>>, vector<1x32xf32>
    %23 = vector.broadcast %22 : vector<1x32xf32> to vector<512x32xf32>
    %24 = arith.addf %21, %23 : vector<512x32xf32>
    %cst_17 = arith.constant 0.00999999977 : f32
    %25 = vector.broadcast %cst_17 : f32 to vector<512x32xf32>
    %26 = arith.mulf %25, %24 : vector<512x32xf32>
    %27 = arith.maximumf %24, %26 : vector<512x32xf32>
    %28 = arith.truncf %27 : vector<512x32xf32> to vector<512x32xbf16>
    %c0_18 = arith.constant 0 : index
    %c0_19 = arith.constant 0 : index
    %29 = vector.load %arg8[%c0_18, %c0_19] : memref<32x8xbf16, #tpu.memory_space<vmem>>, vector<32x8xbf16>
    %cst_20 = arith.constant dense<0.000000e+00> : vector<512x8xf32>
    %30 = tpu.matmul %28, %29, %cst_20 {dimension_numbers = #tpu.dot_dimension_numbers<[1], [0], [0], [1], [0, 0, 1, 1], [], []>} : vector<512x32xbf16>, vector<32x8xbf16>, vector<512x8xf32> -> vector<512x8xf32>
    %c0_21 = arith.constant 0 : index
    %c0_22 = arith.constant 0 : index
    %31 = vector.load %arg9[%c0_21, %c0_22] : memref<1x8xf32, #tpu.memory_space<vmem>>, vector<1x8xf32>
    %32 = vector.broadcast %31 : vector<1x8xf32> to vector<512x8xf32>
    %33 = arith.addf %30, %32 : vector<512x8xf32>
    %c0_23 = arith.constant 0 : index
    %c0_24 = arith.constant 0 : index
    %34 = vector.load %arg10[%c0_23, %c0_24] : memref<512x8xf32, #tpu.memory_space<vmem>>, vector<512x8xf32>
    tpu.vector_store %arg10[%c0_23, %c0_24], %33 {strides = array<i32>} : memref<512x8xf32, #tpu.memory_space<vmem>>, vector<512x8xf32>,
    return
  }
  func.func @transform_0(%arg0: i32) -> (i32, i32) {
    %c0_i32 = arith.constant 0 : i32
    %c0_i32_0 = arith.constant 0 : i32
    return %arg0, %c0_i32 : i32, i32
  }
  func.func @transform_1(%arg0: i32) -> (i32, i32) {
    %c0_i32 = arith.constant 0 : i32
    %c0_i32_0 = arith.constant 0 : i32
    %c0_i32_1 = arith.constant 0 : i32
    return %c0_i32, %c0_i32_0 : i32, i32
  }
  func.func @transform_2(%arg0: i32) -> (i32, i32) {
    %c0_i32 = arith.constant 0 : i32
    %c0_i32_0 = arith.constant 0 : i32
    %c0_i32_1 = arith.constant 0 : i32
    return %c0_i32, %c0_i32_0 : i32, i32
  }
  func.func @transform_3(%arg0: i32) -> (i32, i32) {
    %c0_i32 = arith.constant 0 : i32
    %c0_i32_0 = arith.constant 0 : i32
    %c0_i32_1 = arith.constant 0 : i32
    return %c0_i32, %c0_i32_0 : i32, i32
  }
  func.func @transform_4(%arg0: i32) -> (i32, i32) {
    %c0_i32 = arith.constant 0 : i32
    %c0_i32_0 = arith.constant 0 : i32
    %c0_i32_1 = arith.constant 0 : i32
    return %c0_i32, %c0_i32_0 : i32, i32
  }
  func.func @transform_5(%arg0: i32) -> (i32, i32) {
    %c0_i32 = arith.constant 0 : i32
    %c0_i32_0 = arith.constant 0 : i32
    %c0_i32_1 = arith.constant 0 : i32
    return %c0_i32, %c0_i32_0 : i32, i32
  }
  func.func @transform_6(%arg0: i32) -> (i32, i32) {
    %c0_i32 = arith.constant 0 : i32
    %c0_i32_0 = arith.constant 0 : i32
    %c0_i32_1 = arith.constant 0 : i32
    return %c0_i32, %c0_i32_0 : i32, i32
  }
  func.func @transform_7(%arg0: i32) -> (i32, i32) {
    %c0_i32 = arith.constant 0 : i32
    %c0_i32_0 = arith.constant 0 : i32
    %c0_i32_1 = arith.constant 0 : i32
    return %c0_i32, %c0_i32_0 : i32, i32
  }
  func.func @transform_8(%arg0: i32) -> (i32, i32) {
    %c0_i32 = arith.constant 0 : i32
    %c0_i32_0 = arith.constant 0 : i32
    %c0_i32_1 = arith.constant 0 : i32
    return %c0_i32, %c0_i32_0 : i32, i32
  }
  func.func @transform_9(%arg0: i32) -> (i32, i32) {
    %c0_i32 = arith.constant 0 : i32
    %c0_i32_0 = arith.constant 0 : i32
    return %arg0, %c0_i32 : i32, i32
  }
}

</mosaic_0001>

<llo_original>
// kernel: tpu_custom_call.1
$region0: #{tpu_custom_call.1}
  #allocation0 [shape = 'u32[]', space=smem, size = 0x4, offset = 0x4, fixed_abs, tag = 'smem constant byte address 0x4 - core index']
  #allocation1 [shape = 'u32[144,128]{1,0:T(1,128)}', space=vmem, size = 0x12000, scoped, tag = 'internal scratch']
  %s0 = inlined_call_operand.vmem [shape: f32[512,16], index: 0, kind: input, shape index: {}]
  %s1 = inlined_call_operand.vmem [shape: bf16[16,32], index: 1, kind: input, shape index: {}]
  %s2 = inlined_call_operand.vmem [shape: f32[1,32], index: 2, kind: input, shape index: {}]
  %s3 = inlined_call_operand.vmem [shape: bf16[32,32], index: 3, kind: input, shape index: {}]
  %s4 = inlined_call_operand.vmem [shape: f32[1,32], index: 4, kind: input, shape index: {}]
  %s5 = inlined_call_operand.vmem [shape: bf16[32,32], index: 5, kind: input, shape index: {}]
  %s6 = inlined_call_operand.vmem [shape: f32[1,32], index: 6, kind: input, shape index: {}]
  %s7 = inlined_call_operand.vmem [shape: bf16[32,8], index: 7, kind: input, shape index: {}]
  %s8 = inlined_call_operand.vmem [shape: f32[1,8], index: 8, kind: input, shape index: {}]
  %s9 = inlined_call_operand.vmem [shape: f32[512,8], index: 9, kind: output, shape index: {}]
  %s10 = sld [smem:[#allocation0]]
  $region46: #{tpu_custom_call.1} parent=0
    _
  %s12 = ssub.s32 1, %s10
  %s13 = scalar_select 0, %s12, %s10
  // Predicated region
  $region2: #{tpu_custom_call.1} parent=0 // pred_check
    _
  $region3: #{tpu_custom_call.1} parent=0 // pred_check_branch
    %15 = sbr.rel (0) target = $region5
  $region4: #{tpu_custom_call.1} parent=0 // pred_region
    _
  $region5: #{tpu_custom_call.1} parent=0 // pred_fallthru
    _
  // Predicated region
  $region6: #{tpu_custom_call.1} parent=0 // pred_check
    _
  $region7: #{tpu_custom_call.1} parent=0 // pred_check_branch
    %17 = sbr.rel (0) target = $region9
  $region8: #{tpu_custom_call.1} parent=0 // pred_region
    _
  $region9: #{tpu_custom_call.1} parent=0 // pred_fallthru
    _
  // Predicated region
  $region10: #{tpu_custom_call.1} parent=0 // pred_check
    _
  $region11: #{tpu_custom_call.1} parent=0 // pred_check_branch
    %19 = sbr.rel (0) target = $region13
  $region12: #{tpu_custom_call.1} parent=0 // pred_region
    _
  $region13: #{tpu_custom_call.1} parent=0 // pred_fallthru
    _
  // Predicated region
  $region14: #{tpu_custom_call.1} parent=0 // pred_check
    _
  $region15: #{tpu_custom_call.1} parent=0 // pred_check_branch
    %21 = sbr.rel (0) target = $region17
  $region16: #{tpu_custom_call.1} parent=0 // pred_region
    _
  $region17: #{tpu_custom_call.1} parent=0 // pred_fallthru
    _
  // Predicated region
  $region18: #{tpu_custom_call.1} parent=0 // pred_check
    _
  $region19: #{tpu_custom_call.1} parent=0 // pred_check_branch
    %23 = sbr.rel (0) target = $region21
  $region20: #{tpu_custom_call.1} parent=0 // pred_region
    _
  $region21: #{tpu_custom_call.1} parent=0 // pred_fallthru
    _
  // Predicated region
  $region22: #{tpu_custom_call.1} parent=0 // pred_check
    _
  $region23: #{tpu_custom_call.1} parent=0 // pred_check_branch
    %25 = sbr.rel (0) target = $region25
  $region24: #{tpu_custom_call.1} parent=0 // pred_region
    _
  $region25: #{tpu_custom_call.1} parent=0 // pred_fallthru
    _
  // Predicated region
  $region26: #{tpu_custom_call.1} parent=0 // pred_check
    _
  $region27: #{tpu_custom_call.1} parent=0 // pred_check_branch
    %27 = sbr.rel (0) target = $region29
  $region28: #{tpu_custom_call.1} parent=0 // pred_region
    _
  $region29: #{tpu_custom_call.1} parent=0 // pred_fallthru
    _
  // Predicated region
  $region30: #{tpu_custom_call.1} parent=0 // pred_check
    _
  $region31: #{tpu_custom_call.1} parent=0 // pred_check_branch
    %29 = sbr.rel (0) target = $region33
  $region32: #{tpu_custom_call.1} parent=0 // pred_region
    _
  $region33: #{tpu_custom_call.1} parent=0 // pred_fallthru
    _
  // Predicated region
  $region34: #{tpu_custom_call.1} parent=0 // pred_check
    _
  $region35: #{tpu_custom_call.1} parent=0 // pred_check_branch
    %31 = sbr.rel (0) target = $region37
  $region36: #{tpu_custom_call.1} parent=0 // pred_region
    _
  $region37: #{tpu_custom_call.1} parent=0 // pred_fallthru
    _
  %v33 = vld [vmem:[%s0] sm:$0xff]
  %v34 = vld [vmem:[%s0 + $0x8] sm:$0xff]
  %v35 = vld [vmem:[%s0 + $0x10] sm:$0xff]
  %v36 = vld [vmem:[%s0 + $0x18] sm:$0xff]
  %v37 = vld [vmem:[%s0 + $0x20] sm:$0xff]
  %v38 = vld [vmem:[%s0 + $0x28] sm:$0xff]
  %v39 = vld [vmem:[%s0 + $0x30] sm:$0xff]
  %v40 = vld [vmem:[%s0 + $0x38] sm:$0xff]
  %v41 = vld [vmem:[%s0 + $0x40] sm:$0xff]
  %v42 = vld [vmem:[%s0 + $0x48] sm:$0xff]
  %v43 = vld [vmem:[%s0 + $0x50] sm:$0xff]
  %v44 = vld [vmem:[%s0 + $0x58] sm:$0xff]
  %v45 = vld [vmem:[%s0 + $0x60] sm:$0xff]
  %v46 = vld [vmem:[%s0 + $0x68] sm:$0xff]
  %v47 = vld [vmem:[%s0 + $0x70] sm:$0xff]
  %v48 = vld [vmem:[%s0 + $0x78] sm:$0xff]
  %v49 = vld [vmem:[%s0 + $0x80] sm:$0xff]
  %v50 = vld [vmem:[%s0 + $0x88] sm:$0xff]
  %v51 = vld [vmem:[%s0 + $0x90] sm:$0xff]
  %v52 = vld [vmem:[%s0 + $0x98] sm:$0xff]
  %v53 = vld [vmem:[%s0 + $0xa0] sm:$0xff]
  %v54 = vld [vmem:[%s0 + $0xa8] sm:$0xff]
  %v55 = vld [vmem:[%s0 + $0xb0] sm:$0xff]
  %v56 = vld [vmem:[%s0 + $0xb8] sm:$0xff]
  %v57 = vld [vmem:[%s0 + $0xc0] sm:$0xff]
  %v58 = vld [vmem:[%s0 + $0xc8] sm:$0xff]
  %v59 = vld [vmem:[%s0 + $0xd0] sm:$0xff]
  %v60 = vld [vmem:[%s0 + $0xd8] sm:$0xff]
  %v61 = vld [vmem:[%s0 + $0xe0] sm:$0xff]
  %v62 = vld [vmem:[%s0 + $0xe8] sm:$0xff]
  %v63 = vld [vmem:[%s0 + $0xf0] sm:$0xff]
  %v64 = vld [vmem:[%s0 + $0xf8] sm:$0xff]
  %v65 = vld [vmem:[%s0 + $0x100] sm:$0xff]
  %v66 = vld [vmem:[%s0 + $0x108] sm:$0xff]
  %v67 = vld [vmem:[%s0 + $0x110] sm:$0xff]
  %v68 = vld [vmem:[%s0 + $0x118] sm:$0xff]
  %v69 = vld [vmem:[%s0 + $0x120] sm:$0xff]
  %v70 = vld [vmem:[%s0 + $0x128] sm:$0xff]
  %v71 = vld [vmem:[%s0 + $0x130] sm:$0xff]
  %v72 = vld [vmem:[%s0 + $0x138] sm:$0xff]
  %v73 = vld [vmem:[%s0 + $0x140] sm:$0xff]
  %v74 = vld [vmem:[%s0 + $0x148] sm:$0xff]
  %v75 = vld [vmem:[%s0 + $0x150] sm:$0xff]
  %v76 = vld [vmem:[%s0 + $0x158] sm:$0xff]
  %v77 = vld [vmem:[%s0 + $0x160] sm:$0xff]
  %v78 = vld [vmem:[%s0 + $0x168] sm:$0xff]
  %v79 = vld [vmem:[%s0 + $0x170] sm:$0xff]
  %v80 = vld [vmem:[%s0 + $0x178] sm:$0xff]
  %v81 = vld [vmem:[%s0 + $0x180] sm:$0xff]
  %v82 = vld [vmem:[%s0 + $0x188] sm:$0xff]
  %v83 = vld [vmem:[%s0 + $0x190] sm:$0xff]
  %v84 = vld [vmem:[%s0 + $0x198] sm:$0xff]
  %v85 = vld [vmem:[%s0 + $0x1a0] sm:$0xff]
  %v86 = vld [vmem:[%s0 + $0x1a8] sm:$0xff]
  %v87 = vld [vmem:[%s0 + $0x1b0] sm:$0xff]
  %v88 = vld [vmem:[%s0 + $0x1b8] sm:$0xff]
  %v89 = vld [vmem:[%s0 + $0x1c0] sm:$0xff]
  %v90 = vld [vmem:[%s0 + $0x1c8] sm:$0xff]
  %v91 = vld [vmem:[%s0 + $0x1d0] sm:$0xff]
  %v92 = vld [vmem:[%s0 + $0x1d8] sm:$0xff]
  %v93 = vld [vmem:[%s0 + $0x1e0] sm:$0xff]
  %v94 = vld [vmem:[%s0 + $0x1e8] sm:$0xff]
  %v95 = vld [vmem:[%s0 + $0x1f0] sm:$0xff]
  %v96 = vld [vmem:[%s0 + $0x1f8] sm:$0xff]
  %v97 = vpack.c.bf16 %v34, %v33
  %v98 = vpack.c.bf16 %v36, %v35
  %v99 = vpack.c.bf16 %v38, %v37
  %v100 = vpack.c.bf16 %v40, %v39
  %v101 = vpack.c.bf16 %v42, %v41
  %v102 = vpack.c.bf16 %v44, %v43
  %v103 = vpack.c.bf16 %v46, %v45
  %v104 = vpack.c.bf16 %v48, %v47
  %v105 = vpack.c.bf16 %v50, %v49
  %v106 = vpack.c.bf16 %v52, %v51
  %v107 = vpack.c.bf16 %v54, %v53
  %v108 = vpack.c.bf16 %v56, %v55
  %v109 = vpack.c.bf16 %v58, %v57
  %v110 = vpack.c.bf16 %v60, %v59
  %v111 = vpack.c.bf16 %v62, %v61
  %v112 = vpack.c.bf16 %v64, %v63
  %v113 = vpack.c.bf16 %v66, %v65
  %v114 = vpack.c.bf16 %v68, %v67
  %v115 = vpack.c.bf16 %v70, %v69
  %v116 = vpack.c.bf16 %v72, %v71
  %v117 = vpack.c.bf16 %v74, %v73
  %v118 = vpack.c.bf16 %v76, %v75
  %v119 = vpack.c.bf16 %v78, %v77
  %v120 = vpack.c.bf16 %v80, %v79
  %v121 = vpack.c.bf16 %v82, %v81
  %v122 = vpack.c.bf16 %v84, %v83
  %v123 = vpack.c.bf16 %v86, %v85
  %v124 = vpack.c.bf16 %v88, %v87
  %v125 = vpack.c.bf16 %v90, %v89
  %v126 = vpack.c.bf16 %v92, %v91
  %v127 = vpack.c.bf16 %v94, %v93
  %v128 = vpack.c.bf16 %v96, %v95
  %v129 = vld [vmem:[%s1] sm:$0xf]
  %v130 = vld [vmem:[%s1 + $0x4] sm:$0xf]
  %v131 = vld [vmem:[%s2] sm:$0x1]
  %v133 = vlaneseq
  %v134 = vshrl.u32 %v133, 7
  %v135 = vsub.s32 0, %v134
  %v136 = vrot.slane %v131, %v135
  %v140 = vunpack.c.l.b16 %v129
  %v141 = vunpack.c.l.b16 %v130
  %v142 = vpack.c.b16 %v141, %v140
  %vm144 = vcmask 130048
  %v146 = vsel %vm144, %v97, 0
  %v149 = vsel %vm144, %v98, 0
  %v152 = vsel %vm144, %v99, 0
  %v155 = vsel %vm144, %v100, 0
  %v158 = vsel %vm144, %v101, 0
  %v161 = vsel %vm144, %v102, 0
  %v164 = vsel %vm144, %v103, 0
  %v167 = vsel %vm144, %v104, 0
  %v170 = vsel %vm144, %v105, 0
  %v173 = vsel %vm144, %v106, 0
  %v176 = vsel %vm144, %v107, 0
  %v179 = vsel %vm144, %v108, 0
  %v182 = vsel %vm144, %v109, 0
  %v185 = vsel %vm144, %v110, 0
  %v188 = vsel %vm144, %v111, 0
  %v191 = vsel %vm144, %v112, 0
  %v194 = vsel %vm144, %v113, 0
  %v197 = vsel %vm144, %v114, 0
  %v200 = vsel %vm144, %v115, 0
  %v203 = vsel %vm144, %v116, 0
  %v206 = vsel %vm144, %v117, 0
  %v209 = vsel %vm144, %v118, 0
  %v212 = vsel %vm144, %v119, 0
  %v215 = vsel %vm144, %v120, 0
  %v218 = vsel %vm144, %v121, 0
  %v221 = vsel %vm144, %v122, 0
  %v224 = vsel %vm144, %v123, 0
  %v227 = vsel %vm144, %v124, 0
  %v230 = vsel %vm144, %v125, 0
  %v233 = vsel %vm144, %v126, 0
  %v236 = vsel %vm144, %v127, 0
  %v239 = vsel %vm144, %v128, 0
  %241 = vmatprep.subr.bf16.mxu0 0
  %242 = vmatpush1.bf16.msra.mxu0 %v142
  %243 = vmatprep.subr.bf16.mxu0 0
  %244 = vmatpush1.bf16.msra.mxu0 0
  %245 = vmatprep.subr.bf16.mxu0 0
  %246 = vmatpush1.bf16.msra.mxu0 0
  %247 = vmatprep.subr.bf16.mxu0 0
  %248 = vmatpush1.bf16.msra.mxu0 0
  %249 = vmatprep.subr.bf16.mxu0 0
  %250 = vmatpush1.bf16.msra.mxu0 0
  %251 = vmatprep.subr.bf16.mxu0 0
  %252 = vmatpush1.bf16.msra.mxu0 0
  %253 = vmatprep.subr.bf16.mxu0 0
  %254 = vmatpush1.bf16.msra.mxu0 0
  %255 = vmatprep.subr.bf16.mxu0 0
  %256 = vmatpush1.bf16.msra.mxu0 0
  %257 = vmatprep.subr.bf16.mxu0 0
  %258 = vmatpush1.bf16.msra.mxu0 0
  %259 = vmatprep.subr.bf16.mxu0 0
  %260 = vmatpush1.bf16.msra.mxu0 0
  %261 = vmatprep.subr.bf16.mxu0 0
  %262 = vmatpush1.bf16.msra.mxu0 0
  %263 = vmatprep.subr.bf16.mxu0 0
  %264 = vmatpush1.bf16.msra.mxu0 0
  %265 = vmatprep.subr.bf16.mxu0 0
  %266 = vmatpush1.bf16.msra.mxu0 0
  %267 = vmatprep.subr.bf16.mxu0 0
  %268 = vmatpush1.bf16.msra.mxu0 0
  %269 = vmatprep.subr.bf16.mxu0 0
  %270 = vmatpush1.bf16.msra.mxu0 0
  %271 = vmatprep.subr.bf16.mxu0 0
  %272 = vmatpush1.bf16.msra.mxu0 0
  %273 = vmatprep.mubr.bf16.mxu0 0
  %274 = vmatmul.mubr.bf16.gmra.mrb[0].mxu0 %v146
  %v275 = vpop.f32.mrb[0].mxu0
  %v276 = vadd.f32 %v136, %v275
  %v277 = vpop.f32.mrb[0].mxu0
  %v278 = vpop.f32.mrb[0].mxu0
  %v279 = vadd.f32 %v136, %v278
  %v280 = vpop.f32.mrb[0].mxu0
  %281 = vmatprep.mubr.bf16.mxu0 0
  %282 = vmatmul.mubr.bf16.gmra.mrb[0].mxu0 %v149
  %v283 = vpop.f32.mrb[0].mxu0
  %v284 = vadd.f32 %v136, %v283
  %v285 = vpop.f32.mrb[0].mxu0
  %v286 = vpop.f32.mrb[0].mxu0
  %v287 = vadd.f32 %v136, %v286
  %v288 = vpop.f32.mrb[0].mxu0
  %289 = vmatprep.mubr.bf16.mxu0 0
  %290 = vmatmul.mubr.bf16.gmra.mrb[0].mxu0 %v152
  %v291 = vpop.f32.mrb[0].mxu0
  %v292 = vadd.f32 %v136, %v291
  %v293 = vpop.f32.mrb[0].mxu0
  %v294 = vpop.f32.mrb[0].mxu0
  %v295 = vadd.f32 %v136, %v294
  %v296 = vpop.f32.mrb[0].mxu0
  %297 = vmatprep.mubr.bf16.mxu0 0
  %298 = vmatmul.mubr.bf16.gmra.mrb[0].mxu0 %v155
  %v299 = vpop.f32.mrb[0].mxu0
  %v300 = vadd.f32 %v136, %v299
  %v301 = vpop.f32.mrb[0].mxu0
  %v302 = vpop.f32.mrb[0].mxu0
  %v303 = vadd.f32 %v136, %v302
  %v304 = vpop.f32.mrb[0].mxu0
  %305 = vmatprep.mubr.bf16.mxu0 0
  %306 = vmatmul.mubr.bf16.gmra.mrb[0].mxu0 %v158
  %v307 = vpop.f32.mrb[0].mxu0
  %v308 = vadd.f32 %v136, %v307
  %v309 = vpop.f32.mrb[0].mxu0
  %v310 = vpop.f32.mrb[0].mxu0
  %v311 = vadd.f32 %v136, %v310
  %v312 = vpop.f32.mrb[0].mxu0
  %313 = vmatprep.mubr.bf16.mxu0 0
  %314 = vmatmul.mubr.bf16.gmra.mrb[0].mxu0 %v161
  %v315 = vpop.f32.mrb[0].mxu0
  %v316 = vadd.f32 %v136, %v315
  %v317 = vpop.f32.mrb[0].mxu0
  %v318 = vpop.f32.mrb[0].mxu0
  %v319 = vadd.f32 %v136, %v318
  %v320 = vpop.f32.mrb[0].mxu0
  %321 = vmatprep.mubr.bf16.mxu0 0
  %322 = vmatmul.mubr.bf16.gmra.mrb[0].mxu0 %v164
  %v323 = vpop.f32.mrb[0].mxu0
  %v324 = vadd.f32 %v136, %v323
  %v325 = vpop.f32.mrb[0].mxu0
  %v326 = vpop.f32.mrb[0].mxu0
  %v327 = vadd.f32 %v136, %v326
  %v328 = vpop.f32.mrb[0].mxu0
  %329 = vmatprep.mubr.bf16.mxu0 0
  %330 = vmatmul.mubr.bf16.gmra.mrb[0].mxu0 %v167
  %v331 = vpop.f32.mrb[0].mxu0
  %v332 = vadd.f32 %v136, %v331
  %v333 = vpop.f32.mrb[0].mxu0
  %v334 = vpop.f32.mrb[0].mxu0
  %v335 = vadd.f32 %v136, %v334
  %v336 = vpop.f32.mrb[0].mxu0
  %337 = vmatprep.mubr.bf16.mxu0 0
  %338 = vmatmul.mubr.bf16.gmra.mrb[0].mxu0 %v170
  %v339 = vpop.f32.mrb[0].mxu0
  %v340 = vadd.f32 %v136, %v339
  %v341 = vpop.f32.mrb[0].mxu0
  %v342 = vpop.f32.mrb[0].mxu0
  %v343 = vadd.f32 %v136, %v342
  %v344 = vpop.f32.mrb[0].mxu0
  %345 = vmatprep.mubr.bf16.mxu0 0
  %346 = vmatmul.mubr.bf16.gmra.mrb[0].mxu0 %v173
  %v347 = vpop.f32.mrb[0].mxu0
  %v348 = vadd.f32 %v136, %v347
  %v349 = vpop.f32.mrb[0].mxu0
  %v350 = vpop.f32.mrb[0].mxu0
  %v351 = vadd.f32 %v136, %v350
  %v352 = vpop.f32.mrb[0].mxu0
  %353 = vmatprep.mubr.bf16.mxu0 0
  %354 = vmatmul.mubr.bf16.gmra.mrb[0].mxu0 %v176
  %v355 = vpop.f32.mrb[0].mxu0
  %v356 = vadd.f32 %v136, %v355
  %v357 = vpop.f32.mrb[0].mxu0
  %v358 = vpop.f32.mrb[0].mxu0
  %v359 = vadd.f32 %v136, %v358
  %v360 = vpop.f32.mrb[0].mxu0
  %361 = vmatprep.mubr.bf16.mxu0 0
  %362 = vmatmul.mubr.bf16.gmra.mrb[0].mxu0 %v179
  %v363 = vpop.f32.mrb[0].mxu0
  %v364 = vadd.f32 %v136, %v363
  %v365 = vpop.f32.mrb[0].mxu0
  %v366 = vpop.f32.mrb[0].mxu0
  %v367 = vadd.f32 %v136, %v366
  %v368 = vpop.f32.mrb[0].mxu0
  %369 = vmatprep.mubr.bf16.mxu0 0
  %370 = vmatmul.mubr.bf16.gmra.mrb[0].mxu0 %v182
  %v371 = vpop.f32.mrb[0].mxu0
  %v372 = vadd.f32 %v136, %v371
  %v373 = vpop.f32.mrb[0].mxu0
  %v374 = vpop.f32.mrb[0].mxu0
  %v375 = vadd.f32 %v136, %v374
  %v376 = vpop.f32.mrb[0].mxu0
  %377 = vmatprep.mubr.bf16.mxu0 0
  %378 = vmatmul.mubr.bf16.gmra.mrb[0].mxu0 %v185
  %v379 = vpop.f32.mrb[0].mxu0
  %v380 = vadd.f32 %v136, %v379
  %v381 = vpop.f32.mrb[0].mxu0
  %v382 = vpop.f32.mrb[0].mxu0
  %v383 = vadd.f32 %v136, %v382
  %v384 = vpop.f32.mrb[0].mxu0
  %385 = vmatprep.mubr.bf16.mxu0 0
  %386 = vmatmul.mubr.bf16.gmra.mrb[0].mxu0 %v188
  %v387 = vpop.f32.mrb[0].mxu0
  %v388 = vadd.f32 %v136, %v387
  %v389 = vpop.f32.mrb[0].mxu0
  %v390 = vpop.f32.mrb[0].mxu0
  %v391 = vadd.f32 %v136, %v390
  %v392 = vpop.f32.mrb[0].mxu0
  %393 = vmatprep.mubr.bf16.mxu0 0
  %394 = vmatmul.mubr.bf16.gmra.mrb[0].mxu0 %v191
  %v395 = vpop.f32.mrb[0].mxu0
  %v396 = vadd.f32 %v136, %v395
  %v397 = vpop.f32.mrb[0].mxu0
  %v398 = vpop.f32.mrb[0].mxu0
  %v399 = vadd.f32 %v136, %v398
  %v400 = vpop.f32.mrb[0].mxu0
  %401 = vmatprep.mubr.bf16.mxu0 0
  %402 = vmatmul.mubr.bf16.gmra.mrb[0].mxu0 %v194
  %v403 = vpop.f32.mrb[0].mxu0
  %v404 = vadd.f32 %v136, %v403
  %v405 = vpop.f32.mrb[0].mxu0
  %v406 = vpop.f32.mrb[0].mxu0
  %v407 = vadd.f32 %v136, %v406
  %v408 = vpop.f32.mrb[0].mxu0
  %409 = vmatprep.mubr.bf16.mxu0 0
  %410 = vmatmul.mubr.bf16.gmra.mrb[0].mxu0 %v197
  %v411 = vpop.f32.mrb[0].mxu0
  %v412 = vadd.f32 %v136, %v411
  %v413 = vpop.f32.mrb[0].mxu0
  %v414 = vpop.f32.mrb[0].mxu0
  %v415 = vadd.f32 %v136, %v414
  %v416 = vpop.f32.mrb[0].mxu0
  %417 = vmatprep.mubr.bf16.mxu0 0
  %418 = vmatmul.mubr.bf16.gmra.mrb[0].mxu0 %v200
  %v419 = vpop.f32.mrb[0].mxu0
  %v420 = vadd.f32 %v136, %v419
  %v421 = vpop.f32.mrb[0].mxu0
  %v422 = vpop.f32.mrb[0].mxu0
  %v423 = vadd.f32 %v136, %v422
  %v424 = vpop.f32.mrb[0].mxu0
  %425 = vmatprep.mubr.bf16.mxu0 0
  %426 = vmatmul.mubr.bf16.gmra.mrb[0].mxu0 %v203
  %v427 = vpop.f32.mrb[0].mxu0
  %v428 = vadd.f32 %v136, %v427
  %v429 = vpop.f32.mrb[0].mxu0
  %v430 = vpop.f32.mrb[0].mxu0
  %v431 = vadd.f32 %v136, %v430
  %v432 = vpop.f32.mrb[0].mxu0
  %433 = vmatprep.mubr.bf16.mxu0 0
  %434 = vmatmul.mubr.bf16.gmra.mrb[0].mxu0 %v206
  %v435 = vpop.f32.mrb[0].mxu0
  %v436 = vadd.f32 %v136, %v435
  %v437 = vpop.f32.mrb[0].mxu0
  %v438 = vpop.f32.mrb[0].mxu0
  %v439 = vadd.f32 %v136, %v438
  %v440 = vpop.f32.mrb[0].mxu0
  %441 = vmatprep.mubr.bf16.mxu0 0
  %442 = vmatmul.mubr.bf16.gmra.mrb[0].mxu0 %v209
  %v443 = vpop.f32.mrb[0].mxu0
  %v444 = vadd.f32 %v136, %v443
  %v445 = vpop.f32.mrb[0].mxu0
  %v446 = vpop.f32.mrb[0].mxu0
  %v447 = vadd.f32 %v136, %v446
  %v448 = vpop.f32.mrb[0].mxu0
  %449 = vmatprep.mubr.bf16.mxu0 0
  %450 = vmatmul.mubr.bf16.gmra.mrb[0].mxu0 %v212
  %v451 = vpop.f32.mrb[0].mxu0
  %v452 = vadd.f32 %v136, %v451
  %v453 = vpop.f32.mrb[0].mxu0
  %v454 = vpop.f32.mrb[0].mxu0
  %v455 = vadd.f32 %v136, %v454
  %v456 = vpop.f32.mrb[0].mxu0
  %457 = vmatprep.mubr.bf16.mxu0 0
  %458 = vmatmul.mubr.bf16.gmra.mrb[0].mxu0 %v215
  %v459 = vpop.f32.mrb[0].mxu0
  %v460 = vadd.f32 %v136, %v459
  %v461 = vpop.f32.mrb[0].mxu0
  %v462 = vpop.f32.mrb[0].mxu0
  %v463 = vadd.f32 %v136, %v462
  %v464 = vpop.f32.mrb[0].mxu0
  %465 = vmatprep.mubr.bf16.mxu0 0
  %466 = vmatmul.mubr.bf16.gmra.mrb[0].mxu0 %v218
  %v467 = vpop.f32.mrb[0].mxu0
  %v468 = vadd.f32 %v136, %v467
  %v469 = vpop.f32.mrb[0].mxu0
  %v470 = vpop.f32.mrb[0].mxu0
  %v471 = vadd.f32 %v136, %v470
  %v472 = vpop.f32.mrb[0].mxu0
  %473 = vmatprep.mubr.bf16.mxu0 0
  %474 = vmatmul.mubr.bf16.gmra.mrb[0].mxu0 %v221
  %v475 = vpop.f32.mrb[0].mxu0
  %v476 = vadd.f32 %v136, %v475
  %v477 = vpop.f32.mrb[0].mxu0
  %v478 = vpop.f32.mrb[0].mxu0
  %v479 = vadd.f32 %v136, %v478
  %v480 = vpop.f32.mrb[0].mxu0
  %481 = vmatprep.mubr.bf16.mxu0 0
  %482 = vmatmul.mubr.bf16.gmra.mrb[0].mxu0 %v224
  %v483 = vpop.f32.mrb[0].mxu0
  %v484 = vadd.f32 %v136, %v483
  %v485 = vpop.f32.mrb[0].mxu0
  %v486 = vpop.f32.mrb[0].mxu0
  %v487 = vadd.f32 %v136, %v486
  %v488 = vpop.f32.mrb[0].mxu0
  %489 = vmatprep.mubr.bf16.mxu0 0
  %490 = vmatmul.mubr.bf16.gmra.mrb[0].mxu0 %v227
  %v491 = vpop.f32.mrb[0].mxu0
  %v492 = vadd.f32 %v136, %v491
  %v493 = vpop.f32.mrb[0].mxu0
  %v494 = vpop.f32.mrb[0].mxu0
  %v495 = vadd.f32 %v136, %v494
  %v496 = vpop.f32.mrb[0].mxu0
  %497 = vmatprep.mubr.bf16.mxu0 0
  %498 = vmatmul.mubr.bf16.gmra.mrb[0].mxu0 %v230
  %v499 = vpop.f32.mrb[0].mxu0
  %v500 = vadd.f32 %v136, %v499
  %v501 = vpop.f32.mrb[0].mxu0
  %v502 = vpop.f32.mrb[0].mxu0
  %v503 = vadd.f32 %v136, %v502
  %v504 = vpop.f32.mrb[0].mxu0
  %505 = vmatprep.mubr.bf16.mxu0 0
  %506 = vmatmul.mubr.bf16.gmra.mrb[0].mxu0 %v233
  %v507 = vpop.f32.mrb[0].mxu0
  %v508 = vadd.f32 %v136, %v507
  %v509 = vpop.f32.mrb[0].mxu0
  %v510 = vpop.f32.mrb[0].mxu0
  %v511 = vadd.f32 %v136, %v510
  %v512 = vpop.f32.mrb[0].mxu0
  %513 = vmatprep.mubr.bf16.mxu0 0
  %514 = vmatmul.mubr.bf16.gmra.mrb[0].mxu0 %v236
  %v515 = vpop.f32.mrb[0].mxu0
  %v516 = vadd.f32 %v136, %v515
  %v517 = vpop.f32.mrb[0].mxu0
  %v518 = vpop.f32.mrb[0].mxu0
  %v519 = vadd.f32 %v136, %v518
  %v520 = vpop.f32.mrb[0].mxu0
  %521 = vmatprep.mubr.bf16.mxu0 0
  %522 = vmatmul.mubr.bf16.gmra.mrb[0].mxu0 %v239
  %v523 = vpop.f32.mrb[0].mxu0
  %v524 = vadd.f32 %v136, %v523
  %v525 = vpop.f32.mrb[0].mxu0
  %v526 = vpop.f32.mrb[0].mxu0
  %v527 = vadd.f32 %v136, %v526
  %v528 = vpop.f32.mrb[0].mxu0
  %529 = vdwg.mxu0
  %v530 = vmul.f32 %v276, 0.01
  %v531 = vmul.f32 %v279, 0.01
  %v532 = vmul.f32 %v284, 0.01
  %v533 = vmul.f32 %v287, 0.01
  %v534 = vmul.f32 %v292, 0.01
  %v535 = vmul.f32 %v295, 0.01
  %v536 = vmul.f32 %v300, 0.01
  %v537 = vmul.f32 %v303, 0.01
  %v538 = vmul.f32 %v308, 0.01
  %v539 = vmul.f32 %v311, 0.01
  %v540 = vmul.f32 %v316, 0.01
  %v541 = vmul.f32 %v319, 0.01
  %v542 = vmul.f32 %v324, 0.01
  %v543 = vmul.f32 %v327, 0.01
  %v544 = vmul.f32 %v332, 0.01
  %v545 = vmul.f32 %v335, 0.01
  %v546 = vmul.f32 %v340, 0.01
  %v547 = vmul.f32 %v343, 0.01
  %v548 = vmul.f32 %v348, 0.01
  %v549 = vmul.f32 %v351, 0.01
  %v550 = vmul.f32 %v356, 0.01
  %v551 = vmul.f32 %v359, 0.01
  %v552 = vmul.f32 %v364, 0.01
  %v553 = vmul.f32 %v367, 0.01
  %v554 = vmul.f32 %v372, 0.01
  %v555 = vmul.f32 %v375, 0.01
  %v556 = vmul.f32 %v380, 0.01
  %v557 = vmul.f32 %v383, 0.01
  %v558 = vmul.f32 %v388, 0.01
  %v559 = vmul.f32 %v391, 0.01
  %v560 = vmul.f32 %v396, 0.01
  %v561 = vmul.f32 %v399, 0.01
  %v562 = vmul.f32 %v404, 0.01
  %v563 = vmul.f32 %v407, 0.01
  %v564 = vmul.f32 %v412, 0.01
  %v565 = vmul.f32 %v415, 0.01
  %v566 = vmul.f32 %v420, 0.01
  %v567 = vmul.f32 %v423, 0.01
  %v568 = vmul.f32 %v428, 0.01
  %v569 = vmul.f32 %v431, 0.01
  %v570 = vmul.f32 %v436, 0.01
  %v571 = vmul.f32 %v439, 0.01
  %v572 = vmul.f32 %v444, 0.01
  %v573 = vmul.f32 %v447, 0.01
  %v574 = vmul.f32 %v452, 0.01
  %v575 = vmul.f32 %v455, 0.01
  %v576 = vmul.f32 %v460, 0.01
  %v577 = vmul.f32 %v463, 0.01
  %v578 = vmul.f32 %v468, 0.01
  %v579 = vmul.f32 %v471, 0.01
  %v580 = vmul.f32 %v476, 0.01
  %v581 = vmul.f32 %v479, 0.01
  %v582 = vmul.f32 %v484, 0.01
  %v583 = vmul.f32 %v487, 0.01
  %v584 = vmul.f32 %v492, 0.01
  %v585 = vmul.f32 %v495, 0.01
  %v586 = vmul.f32 %v500, 0.01
  %v587 = vmul.f32 %v503, 0.01
  %v588 = vmul.f32 %v508, 0.01
  %v589 = vmul.f32 %v511, 0.01
  %v590 = vmul.f32 %v516, 0.01
  %v591 = vmul.f32 %v519, 0.01
  %v592 = vmul.f32 %v524, 0.01
  %v593 = vmul.f32 %v527, 0.01
  %v594 = vmax.f32 %v276, %v530
  %v595 = vmax.f32 %v279, %v531
  %v596 = vmax.f32 %v284, %v532
  %v597 = vmax.f32 %v287, %v533
  %v598 = vmax.f32 %v292, %v534
  %v599 = vmax.f32 %v295, %v535
  %v600 = vmax.f32 %v300, %v536
  %v601 = vmax.f32 %v303, %v537
  %v602 = vmax.f32 %v308, %v538
  %v603 = vmax.f32 %v311, %v539
  %v604 = vmax.f32 %v316, %v540
  %v605 = vmax.f32 %v319, %v541
  %v606 = vmax.f32 %v324, %v542
  %v607 = vmax.f32 %v327, %v543
  %v608 = vmax.f32 %v332, %v544
  %v609 = vmax.f32 %v335, %v545
  %v610 = vmax.f32 %v340, %v546
  %v611 = vmax.f32 %v343, %v547
  %v612 = vmax.f32 %v348, %v548
  %v613 = vmax.f32 %v351, %v549
  %v614 = vmax.f32 %v356, %v550
  %v615 = vmax.f32 %v359, %v551
  %v616 = vmax.f32 %v364, %v552
  %v617 = vmax.f32 %v367, %v553
  %v618 = vmax.f32 %v372, %v554
  %v619 = vmax.f32 %v375, %v555
  %v620 = vmax.f32 %v380, %v556
  %v621 = vmax.f32 %v383, %v557
  %v622 = vmax.f32 %v388, %v558
  %v623 = vmax.f32 %v391, %v559
  %v624 = vmax.f32 %v396, %v560
  %v625 = vmax.f32 %v399, %v561
  %v626 = vmax.f32 %v404, %v562
  %v627 = vmax.f32 %v407, %v563
  %v628 = vmax.f32 %v412, %v564
  %v629 = vmax.f32 %v415, %v565
  %v630 = vmax.f32 %v420, %v566
  %v631 = vmax.f32 %v423, %v567
  %v632 = vmax.f32 %v428, %v568
  %v633 = vmax.f32 %v431, %v569
  %v634 = vmax.f32 %v436, %v570
  %v635 = vmax.f32 %v439, %v571
  %v636 = vmax.f32 %v444, %v572
  %v637 = vmax.f32 %v447, %v573
  %v638 = vmax.f32 %v452, %v574
  %v639 = vmax.f32 %v455, %v575
  %v640 = vmax.f32 %v460, %v576
  %v641 = vmax.f32 %v463, %v577
  %v642 = vmax.f32 %v468, %v578
  %v643 = vmax.f32 %v471, %v579
  %v644 = vmax.f32 %v476, %v580
  %v645 = vmax.f32 %v479, %v581
  %v646 = vmax.f32 %v484, %v582
  %v647 = vmax.f32 %v487, %v583
  %v648 = vmax.f32 %v492, %v584
  %v649 = vmax.f32 %v495, %v585
  %v650 = vmax.f32 %v500, %v586
  %v651 = vmax.f32 %v503, %v587
  %v652 = vmax.f32 %v508, %v588
  %v653 = vmax.f32 %v511, %v589
  %v654 = vmax.f32 %v516, %v590
  %v655 = vmax.f32 %v519, %v591
  %v656 = vmax.f32 %v524, %v592
  %v657 = vmax.f32 %v527, %v593
  %v658 = vpack.c.bf16 %v595, %v594
  %v659 = vpack.c.bf16 %v597, %v596
  %v660 = vpack.c.bf16 %v599, %v598
  %v661 = vpack.c.bf16 %v601, %v600
  %v662 = vpack.c.bf16 %v603, %v602
  %v663 = vpack.c.bf16 %v605, %v604
  %v664 = vpack.c.bf16 %v607, %v606
  %v665 = vpack.c.bf16 %v609, %v608
  %v666 = vpack.c.bf16 %v611, %v610
  %v667 = vpack.c.bf16 %v613, %v612
  %v668 = vpack.c.bf16 %v615, %v614
  %v669 = vpack.c.bf16 %v617, %v616
  %v670 = vpack.c.bf16 %v619, %v618
  %v671 = vpack.c.bf16 %v621, %v620
  %v672 = vpack.c.bf16 %v623, %v622
  %v673 = vpack.c.bf16 %v625, %v624
  %v674 = vpack.c.bf16 %v627, %v626
  %v675 = vpack.c.bf16 %v629, %v628
  %v676 = vpack.c.bf16 %v631, %v630
  %v677 = vpack.c.bf16 %v633, %v632
  %v678 = vpack.c.bf16 %v635, %v634
  %v679 = vpack.c.bf16 %v637, %v636
  %v680 = vpack.c.bf16 %v639, %v638
  %v681 = vpack.c.bf16 %v641, %v640
  %v682 = vpack.c.bf16 %v643, %v642
  %v683 = vpack.c.bf16 %v645, %v644
  %v684 = vpack.c.bf16 %v647, %v646
  %v685 = vpack.c.bf16 %v649, %v648
  %v686 = vpack.c.bf16 %v651, %v650
  %v687 = vpack.c.bf16 %v653, %v652
  %v688 = vpack.c.bf16 %v655, %v654
  %v689 = vpack.c.bf16 %v657, %v656
  %v690 = vld [vmem:[%s3] sm:$0xf]
  %v691 = vld [vmem:[%s3 + $0x4] sm:$0xf]
  %v692 = vld [vmem:[%s3 + $0x8] sm:$0xf]
  %v693 = vld [vmem:[%s3 + $0xc] sm:$0xf]
  %v694 = vld [vmem:[%s4] sm:$0x1]
  %v696 = vlaneseq
  %v697 = vshrl.u32 %v696, 7
  %v698 = vsub.s32 0, %v697
  %v699 = vrot.slane %v694, %v698
  %v705 = vunpack.c.l.b16 %v690
  %v706 = vunpack.c.l.b16 %v691
  %v707 = vunpack.c.l.b16 %v692
  %v708 = vunpack.c.l.b16 %v693
  %v709 = vpack.c.b16 %v706, %v705
  %v710 = vpack.c.b16 %v708, %v707
  %vm713 = vcmask 261120
  %v715 = vsel %vm713, %v658, 0
  %v718 = vsel %vm713, %v659, 0
  %v721 = vsel %vm713, %v660, 0
  %v724 = vsel %vm713, %v661, 0
  %v727 = vsel %vm713, %v662, 0
  %v730 = vsel %vm713, %v663, 0
  %v733 = vsel %vm713, %v664, 0
  %v736 = vsel %vm713, %v665, 0
  %v739 = vsel %vm713, %v666, 0
  %v742 = vsel %vm713, %v667, 0
  %v745 = vsel %vm713, %v668, 0
  %v748 = vsel %vm713, %v669, 0
  %v751 = vsel %vm713, %v670, 0
  %v754 = vsel %vm713, %v671, 0
  %v757 = vsel %vm713, %v672, 0
  %v760 = vsel %vm713, %v673, 0
  %v763 = vsel %vm713, %v674, 0
  %v766 = vsel %vm713, %v675, 0
  %v769 = vsel %vm713, %v676, 0
  %v772 = vsel %vm713, %v677, 0
  %v775 = vsel %vm713, %v678, 0
  %v778 = vsel %vm713, %v679, 0
  %v781 = vsel %vm713, %v680, 0
  %v784 = vsel %vm713, %v681, 0
  %v787 = vsel %vm713, %v682, 0
  %v790 = vsel %vm713, %v683, 0
  %v793 = vsel %vm713, %v684, 0
  %v796 = vsel %vm713, %v685, 0
  %v799 = vsel %vm713, %v686, 0
  %v802 = vsel %vm713, %v687, 0
  %v805 = vsel %vm713, %v688, 0
  %v808 = vsel %vm713, %v689, 0
  %810 = vmatprep.subr.bf16.mxu0 0
  %811 = vmatpush1.bf16.msra.mxu0 %v709
  %812 = vmatprep.subr.bf16.mxu0 0
  %813 = vmatpush1.bf16.msra.mxu0 %v710
  %814 = vmatprep.subr.bf16.mxu0 0
  %815 = vmatpush1.bf16.msra.mxu0 0
  %816 = vmatprep.subr.bf16.mxu0 0
  %817 = vmatpush1.bf16.msra.mxu0 0
  %818 = vmatprep.subr.bf16.mxu0 0
  %819 = vmatpush1.bf16.msra.mxu0 0
  %820 = vmatprep.subr.bf16.mxu0 0
  %821 = vmatpush1.bf16.msra.mxu0 0
  %822 = vmatprep.subr.bf16.mxu0 0
  %823 = vmatpush1.bf16.msra.mxu0 0
  %824 = vmatprep.subr.bf16.mxu0 0
  %825 = vmatpush1.bf16.msra.mxu0 0
  %826 = vmatprep.subr.bf16.mxu0 0
  %827 = vmatpush1.bf16.msra.mxu0 0
  %828 = vmatprep.subr.bf16.mxu0 0
  %829 = vmatpush1.bf16.msra.mxu0 0
  %830 = vmatprep.subr.bf16.mxu0 0
  %831 = vmatpush1.bf16.msra.mxu0 0
  %832 = vmatprep.subr.bf16.mxu0 0
  %833 = vmatpush1.bf16.msra.mxu0 0
  %834 = vmatprep.subr.bf16.mxu0 0
  %835 = vmatpush1.bf16.msra.mxu0 0
  %836 = vmatprep.subr.bf16.mxu0 0
  %837 = vmatpush1.bf16.msra.mxu0 0
  %838 = vmatprep.subr.bf16.mxu0 0
  %839 = vmatpush1.bf16.msra.mxu0 0
  %840 = vmatprep.subr.bf16.mxu0 0
  %841 = vmatpush1.bf16.msra.mxu0 0
  %842 = vmatprep.mubr.bf16.mxu0 0
  %843 = vmatmul.mubr.bf16.gmra.mrb[0].mxu0 %v715
  %v844 = vpop.f32.mrb[0].mxu0
  %v845 = vadd.f32 %v699, %v844
  %v846 = vpop.f32.mrb[0].mxu0
  %v847 = vpop.f32.mrb[0].mxu0
  %v848 = vadd.f32 %v699, %v847
  %v849 = vpop.f32.mrb[0].mxu0
  %850 = vmatprep.mubr.bf16.mxu0 0
  %851 = vmatmul.mubr.bf16.gmra.mrb[0].mxu0 %v718
  %v852 = vpop.f32.mrb[0].mxu0
  %v853 = vadd.f32 %v699, %v852
  %v854 = vpop.f32.mrb[0].mxu0
  %v855 = vpop.f32.mrb[0].mxu0
  %v856 = vadd.f32 %v699, %v855
  %v857 = vpop.f32.mrb[0].mxu0
  %858 = vmatprep.mubr.bf16.mxu0 0
  %859 = vmatmul.mubr.bf16.gmra.mrb[0].mxu0 %v721
  %v860 = vpop.f32.mrb[0].mxu0
  %v861 = vadd.f32 %v699, %v860
  %v862 = vpop.f32.mrb[0].mxu0
  %v863 = vpop.f32.mrb[0].mxu0
  %v864 = vadd.f32 %v699, %v863
  %v865 = vpop.f32.mrb[0].mxu0
  %866 = vmatprep.mubr.bf16.mxu0 0
  %867 = vmatmul.mubr.bf16.gmra.mrb[0].mxu0 %v724
  %v868 = vpop.f32.mrb[0].mxu0
  %v869 = vadd.f32 %v699, %v868
  %v870 = vpop.f32.mrb[0].mxu0
  %v871 = vpop.f32.mrb[0].mxu0
  %v872 = vadd.f32 %v699, %v871
  %v873 = vpop.f32.mrb[0].mxu0
  %874 = vmatprep.mubr.bf16.mxu0 0
  %875 = vmatmul.mubr.bf16.gmra.mrb[0].mxu0 %v727
  %v876 = vpop.f32.mrb[0].mxu0
  %v877 = vadd.f32 %v699, %v876
  %v878 = vpop.f32.mrb[0].mxu0
  %v879 = vpop.f32.mrb[0].mxu0
  %v880 = vadd.f32 %v699, %v879
  %v881 = vpop.f32.mrb[0].mxu0
  %882 = vmatprep.mubr.bf16.mxu0 0
  %883 = vmatmul.mubr.bf16.gmra.mrb[0].mxu0 %v730
  %v884 = vpop.f32.mrb[0].mxu0
  %v885 = vadd.f32 %v699, %v884
  %v886 = vpop.f32.mrb[0].mxu0
  %v887 = vpop.f32.mrb[0].mxu0
  %v888 = vadd.f32 %v699, %v887
  %v889 = vpop.f32.mrb[0].mxu0
  %890 = vmatprep.mubr.bf16.mxu0 0
  %891 = vmatmul.mubr.bf16.gmra.mrb[0].mxu0 %v733
  %v892 = vpop.f32.mrb[0].mxu0
  %v893 = vadd.f32 %v699, %v892
  %v894 = vpop.f32.mrb[0].mxu0
  %v895 = vpop.f32.mrb[0].mxu0
  %v896 = vadd.f32 %v699, %v895
  %v897 = vpop.f32.mrb[0].mxu0
  %898 = vmatprep.mubr.bf16.mxu0 0
  %899 = vmatmul.mubr.bf16.gmra.mrb[0].mxu0 %v736
  %v900 = vpop.f32.mrb[0].mxu0
  %v901 = vadd.f32 %v699, %v900
  %v902 = vpop.f32.mrb[0].mxu0
  %v903 = vpop.f32.mrb[0].mxu0
  %v904 = vadd.f32 %v699, %v903
  %v905 = vpop.f32.mrb[0].mxu0
  %906 = vmatprep.mubr.bf16.mxu0 0
  %907 = vmatmul.mubr.bf16.gmra.mrb[0].mxu0 %v739
  %v908 = vpop.f32.mrb[0].mxu0
  %v909 = vadd.f32 %v699, %v908
  %v910 = vpop.f32.mrb[0].mxu0
  %v911 = vpop.f32.mrb[0].mxu0
  %v912 = vadd.f32 %v699, %v911
  %v913 = vpop.f32.mrb[0].mxu0
  %914 = vmatprep.mubr.bf16.mxu0 0
  %915 = vmatmul.mubr.bf16.gmra.mrb[0].mxu0 %v742
  %v916 = vpop.f32.mrb[0].mxu0
  %v917 = vadd.f32 %v699, %v916
  %v918 = vpop.f32.mrb[0].mxu0
  %v919 = vpop.f32.mrb[0].mxu0
  %v920 = vadd.f32 %v699, %v919
  %v921 = vpop.f32.mrb[0].mxu0
  %922 = vmatprep.mubr.bf16.mxu0 0
  %923 = vmatmul.mubr.bf16.gmra.mrb[0].mxu0 %v745
  %v924 = vpop.f32.mrb[0].mxu0
  %v925 = vadd.f32 %v699, %v924
  %v926 = vpop.f32.mrb[0].mxu0
  %v927 = vpop.f32.mrb[0].mxu0
  %v928 = vadd.f32 %v699, %v927
  %v929 = vpop.f32.mrb[0].mxu0
  %930 = vmatprep.mubr.bf16.mxu0 0
  %931 = vmatmul.mubr.bf16.gmra.mrb[0].mxu0 %v748
  %v932 = vpop.f32.mrb[0].mxu0
  %v933 = vadd.f32 %v699, %v932
  %v934 = vpop.f32.mrb[0].mxu0
  %v935 = vpop.f32.mrb[0].mxu0
  %v936 = vadd.f32 %v699, %v935
  %v937 = vpop.f32.mrb[0].mxu0
  %938 = vmatprep.mubr.bf16.mxu0 0
  %939 = vmatmul.mubr.bf16.gmra.mrb[0].mxu0 %v751
  %v940 = vpop.f32.mrb[0].mxu0
  %v941 = vadd.f32 %v699, %v940
  %v942 = vpop.f32.mrb[0].mxu0
  %v943 = vpop.f32.mrb[0].mxu0
  %v944 = vadd.f32 %v699, %v943
  %v945 = vpop.f32.mrb[0].mxu0
  %946 = vmatprep.mubr.bf16.mxu0 0
  %947 = vmatmul.mubr.bf16.gmra.mrb[0].mxu0 %v754
  %v948 = vpop.f32.mrb[0].mxu0
  %v949 = vadd.f32 %v699, %v948
  %v950 = vpop.f32.mrb[0].mxu0
  %v951 = vpop.f32.mrb[0].mxu0
  %v952 = vadd.f32 %v699, %v951
  %v953 = vpop.f32.mrb[0].mxu0
  %954 = vmatprep.mubr.bf16.mxu0 0
  %955 = vmatmul.mubr.bf16.gmra.mrb[0].mxu0 %v757
  %v956 = vpop.f32.mrb[0].mxu0
  %v957 = vadd.f32 %v699, %v956
  %v958 = vpop.f32.mrb[0].mxu0
  %v959 = vpop.f32.mrb[0].mxu0
  %v960 = vadd.f32 %v699, %v959
  %v961 = vpop.f32.mrb[0].mxu0
  %962 = vmatprep.mubr.bf16.mxu0 0
  %963 = vmatmul.mubr.bf16.gmra.mrb[0].mxu0 %v760
  %v964 = vpop.f32.mrb[0].mxu0
  %v965 = vadd.f32 %v699, %v964
  %v966 = vpop.f32.mrb[0].mxu0
  %v967 = vpop.f32.mrb[0].mxu0
  %v968 = vadd.f32 %v699, %v967
  %v969 = vpop.f32.mrb[0].mxu0
  %970 = vmatprep.mubr.bf16.mxu0 0
  %971 = vmatmul.mubr.bf16.gmra.mrb[0].mxu0 %v763
  %v972 = vpop.f32.mrb[0].mxu0
  %v973 = vadd.f32 %v699, %v972
  %v974 = vpop.f32.mrb[0].mxu0
  %v975 = vpop.f32.mrb[0].mxu0
  %v976 = vadd.f32 %v699, %v975
  %v977 = vpop.f32.mrb[0].mxu0
  %978 = vmatprep.mubr.bf16.mxu0 0
  %979 = vmatmul.mubr.bf16.gmra.mrb[0].mxu0 %v766
  %v980 = vpop.f32.mrb[0].mxu0
  %v981 = vadd.f32 %v699, %v980
  %v982 = vpop.f32.mrb[0].mxu0
  %v983 = vpop.f32.mrb[0].mxu0
  %v984 = vadd.f32 %v699, %v983
  %v985 = vpop.f32.mrb[0].mxu0
  %986 = vmatprep.mubr.bf16.mxu0 0
  %987 = vmatmul.mubr.bf16.gmra.mrb[0].mxu0 %v769
  %v988 = vpop.f32.mrb[0].mxu0
  %v989 = vadd.f32 %v699, %v988
  %v990 = vpop.f32.mrb[0].mxu0
  %v991 = vpop.f32.mrb[0].mxu0
  %v992 = vadd.f32 %v699, %v991
  %v993 = vpop.f32.mrb[0].mxu0
  %994 = vmatprep.mubr.bf16.mxu0 0
  %995 = vmatmul.mubr.bf16.gmra.mrb[0].mxu0 %v772
  %v996 = vpop.f32.mrb[0].mxu0
  %v997 = vadd.f32 %v699, %v996
  %v998 = vpop.f32.mrb[0].mxu0
  %v999 = vpop.f32.mrb[0].mxu0
  %v1000 = vadd.f32 %v699, %v999
  %v1001 = vpop.f32.mrb[0].mxu0
  %1002 = vmatprep.mubr.bf16.mxu0 0
  %1003 = vmatmul.mubr.bf16.gmra.mrb[0].mxu0 %v775
  %v1004 = vpop.f32.mrb[0].mxu0
  %v1005 = vadd.f32 %v699, %v1004
  %v1006 = vpop.f32.mrb[0].mxu0
  %v1007 = vpop.f32.mrb[0].mxu0
  %v1008 = vadd.f32 %v699, %v1007
  %v1009 = vpop.f32.mrb[0].mxu0
  %1010 = vmatprep.mubr.bf16.mxu0 0
  %1011 = vmatmul.mubr.bf16.gmra.mrb[0].mxu0 %v778
  %v1012 = vpop.f32.mrb[0].mxu0
  %v1013 = vadd.f32 %v699, %v1012
  %v1014 = vpop.f32.mrb[0].mxu0
  %v1015 = vpop.f32.mrb[0].mxu0
  %v1016 = vadd.f32 %v699, %v1015
  %v1017 = vpop.f32.mrb[0].mxu0
  %1018 = vmatprep.mubr.bf16.mxu0 0
  %1019 = vmatmul.mubr.bf16.gmra.mrb[0].mxu0 %v781
  %v1020 = vpop.f32.mrb[0].mxu0
  %v1021 = vadd.f32 %v699, %v1020
  %v1022 = vpop.f32.mrb[0].mxu0
  %v1023 = vpop.f32.mrb[0].mxu0
  %v1024 = vadd.f32 %v699, %v1023
  %v1025 = vpop.f32.mrb[0].mxu0
  %1026 = vmatprep.mubr.bf16.mxu0 0
  %1027 = vmatmul.mubr.bf16.gmra.mrb[0].mxu0 %v784
  %v1028 = vpop.f32.mrb[0].mxu0
  %v1029 = vadd.f32 %v699, %v1028
  %v1030 = vpop.f32.mrb[0].mxu0
  %v1031 = vpop.f32.mrb[0].mxu0
  %v1032 = vadd.f32 %v699, %v1031
  %v1033 = vpop.f32.mrb[0].mxu0
  %1034 = vmatprep.mubr.bf16.mxu0 0
  %1035 = vmatmul.mubr.bf16.gmra.mrb[0].mxu0 %v787
  %v1036 = vpop.f32.mrb[0].mxu0
  %v1037 = vadd.f32 %v699, %v1036
  %v1038 = vpop.f32.mrb[0].mxu0
  %v1039 = vpop.f32.mrb[0].mxu0
  %v1040 = vadd.f32 %v699, %v1039
  %v1041 = vpop.f32.mrb[0].mxu0
  %1042 = vmatprep.mubr.bf16.mxu0 0
  %1043 = vmatmul.mubr.bf16.gmra.mrb[0].mxu0 %v790
  %v1044 = vpop.f32.mrb[0].mxu0
  %v1045 = vadd.f32 %v699, %v1044
  %v1046 = vpop.f32.mrb[0].mxu0
  %v1047 = vpop.f32.mrb[0].mxu0
  %v1048 = vadd.f32 %v699, %v1047
  %v1049 = vpop.f32.mrb[0].mxu0
  %1050 = vmatprep.mubr.bf16.mxu0 0
  %1051 = vmatmul.mubr.bf16.gmra.mrb[0].mxu0 %v793
  %v1052 = vpop.f32.mrb[0].mxu0
  %v1053 = vadd.f32 %v699, %v1052
  %v1054 = vpop.f32.mrb[0].mxu0
  %v1055 = vpop.f32.mrb[0].mxu0
  %v1056 = vadd.f32 %v699, %v1055
  %v1057 = vpop.f32.mrb[0].mxu0
  %1058 = vmatprep.mubr.bf16.mxu0 0
  %1059 = vmatmul.mubr.bf16.gmra.mrb[0].mxu0 %v796
  %v1060 = vpop.f32.mrb[0].mxu0
  %v1061 = vadd.f32 %v699, %v1060
  %v1062 = vpop.f32.mrb[0].mxu0
  %v1063 = vpop.f32.mrb[0].mxu0
  %v1064 = vadd.f32 %v699, %v1063
  %v1065 = vpop.f32.mrb[0].mxu0
  %1066 = vmatprep.mubr.bf16.mxu0 0
  %1067 = vmatmul.mubr.bf16.gmra.mrb[0].mxu0 %v799
  %v1068 = vpop.f32.mrb[0].mxu0
  %v1069 = vadd.f32 %v699, %v1068
  %v1070 = vpop.f32.mrb[0].mxu0
  %v1071 = vpop.f32.mrb[0].mxu0
  %v1072 = vadd.f32 %v699, %v1071
  %v1073 = vpop.f32.mrb[0].mxu0
  %1074 = vmatprep.mubr.bf16.mxu0 0
  %1075 = vmatmul.mubr.bf16.gmra.mrb[0].mxu0 %v802
  %v1076 = vpop.f32.mrb[0].mxu0
  %v1077 = vadd.f32 %v699, %v1076
  %v1078 = vpop.f32.mrb[0].mxu0
  %v1079 = vpop.f32.mrb[0].mxu0
  %v1080 = vadd.f32 %v699, %v1079
  %v1081 = vpop.f32.mrb[0].mxu0
  %1082 = vmatprep.mubr.bf16.mxu0 0
  %1083 = vmatmul.mubr.bf16.gmra.mrb[0].mxu0 %v805
  %v1084 = vpop.f32.mrb[0].mxu0
  %v1085 = vadd.f32 %v699, %v1084
  %v1086 = vpop.f32.mrb[0].mxu0
  %v1087 = vpop.f32.mrb[0].mxu0
  %v1088 = vadd.f32 %v699, %v1087
  %v1089 = vpop.f32.mrb[0].mxu0
  %1090 = vmatprep.mubr.bf16.mxu0 0
  %1091 = vmatmul.mubr.bf16.gmra.mrb[0].mxu0 %v808
  %v1092 = vpop.f32.mrb[0].mxu0
  %v1093 = vadd.f32 %v699, %v1092
  %v1094 = vpop.f32.mrb[0].mxu0
  %v1095 = vpop.f32.mrb[0].mxu0
  %v1096 = vadd.f32 %v699, %v1095
  %v1097 = vpop.f32.mrb[0].mxu0
  %1098 = vdwg.mxu0
  %v1099 = vmul.f32 %v845, 0.01
  %v1100 = vmul.f32 %v848, 0.01
  %v1101 = vmul.f32 %v853, 0.01
  %v1102 = vmul.f32 %v856, 0.01
  %v1103 = vmul.f32 %v861, 0.01
  %v1104 = vmul.f32 %v864, 0.01
  %v1105 = vmul.f32 %v869, 0.01
  %v1106 = vmul.f32 %v872, 0.01
  %v1107 = vmul.f32 %v877, 0.01
  %v1108 = vmul.f32 %v880, 0.01
  %v1109 = vmul.f32 %v885, 0.01
  %v1110 = vmul.f32 %v888, 0.01
  %v1111 = vmul.f32 %v893, 0.01
  %v1112 = vmul.f32 %v896, 0.01
  %v1113 = vmul.f32 %v901, 0.01
  %v1114 = vmul.f32 %v904, 0.01
  %v1115 = vmul.f32 %v909, 0.01
  %v1116 = vmul.f32 %v912, 0.01
  %v1117 = vmul.f32 %v917, 0.01
  %v1118 = vmul.f32 %v920, 0.01
  %v1119 = vmul.f32 %v925, 0.01
  %v1120 = vmul.f32 %v928, 0.01
  %v1121 = vmul.f32 %v933, 0.01
  %v1122 = vmul.f32 %v936, 0.01
  %v1123 = vmul.f32 %v941, 0.01
  %v1124 = vmul.f32 %v944, 0.01
  %v1125 = vmul.f32 %v949, 0.01
  %v1126 = vmul.f32 %v952, 0.01
  %v1127 = vmul.f32 %v957, 0.01
  %v1128 = vmul.f32 %v960, 0.01
  %v1129 = vmul.f32 %v965, 0.01
  %v1130 = vmul.f32 %v968, 0.01
  %v1131 = vmul.f32 %v973, 0.01
  %v1132 = vmul.f32 %v976, 0.01
  %v1133 = vmul.f32 %v981, 0.01
  %v1134 = vmul.f32 %v984, 0.01
  %v1135 = vmul.f32 %v989, 0.01
  %v1136 = vmul.f32 %v992, 0.01
  %v1137 = vmul.f32 %v997, 0.01
  %v1138 = vmul.f32 %v1000, 0.01
  %v1139 = vmul.f32 %v1005, 0.01
  %v1140 = vmul.f32 %v1008, 0.01
  %v1141 = vmul.f32 %v1013, 0.01
  %v1142 = vmul.f32 %v1016, 0.01
  %v1143 = vmul.f32 %v1021, 0.01
  %v1144 = vmul.f32 %v1024, 0.01
  %v1145 = vmul.f32 %v1029, 0.01
  %v1146 = vmul.f32 %v1032, 0.01
  %v1147 = vmul.f32 %v1037, 0.01
  %v1148 = vmul.f32 %v1040, 0.01
  %v1149 = vmul.f32 %v1045, 0.01
  %v1150 = vmul.f32 %v1048, 0.01
  %v1151 = vmul.f32 %v1053, 0.01
  %v1152 = vmul.f32 %v1056, 0.01
  %v1153 = vmul.f32 %v1061, 0.01
  %v1154 = vmul.f32 %v1064, 0.01
  %v1155 = vmul.f32 %v1069, 0.01
  %v1156 = vmul.f32 %v1072, 0.01
  %v1157 = vmul.f32 %v1077, 0.01
  %v1158 = vmul.f32 %v1080, 0.01
  %v1159 = vmul.f32 %v1085, 0.01
  %v1160 = vmul.f32 %v1088, 0.01
  %v1161 = vmul.f32 %v1093, 0.01
  %v1162 = vmul.f32 %v1096, 0.01
  %v1163 = vmax.f32 %v845, %v1099
  %v1164 = vmax.f32 %v848, %v1100
  %v1165 = vmax.f32 %v853, %v1101
  %v1166 = vmax.f32 %v856, %v1102
  %v1167 = vmax.f32 %v861, %v1103
  %v1168 = vmax.f32 %v864, %v1104
  %v1169 = vmax.f32 %v869, %v1105
  %v1170 = vmax.f32 %v872, %v1106
  %v1171 = vmax.f32 %v877, %v1107
  %v1172 = vmax.f32 %v880, %v1108
  %v1173 = vmax.f32 %v885, %v1109
  %v1174 = vmax.f32 %v888, %v1110
  %v1175 = vmax.f32 %v893, %v1111
  %v1176 = vmax.f32 %v896, %v1112
  %v1177 = vmax.f32 %v901, %v1113
  %v1178 = vmax.f32 %v904, %v1114
  %v1179 = vmax.f32 %v909, %v1115
  %v1180 = vmax.f32 %v912, %v1116
  %v1181 = vmax.f32 %v917, %v1117
  %v1182 = vmax.f32 %v920, %v1118
  %v1183 = vmax.f32 %v925, %v1119
  %v1184 = vmax.f32 %v928, %v1120
  %v1185 = vmax.f32 %v933, %v1121
  %v1186 = vmax.f32 %v936, %v1122
  %v1187 = vmax.f32 %v941, %v1123
  %v1188 = vmax.f32 %v944, %v1124
  %v1189 = vmax.f32 %v949, %v1125
  %v1190 = vmax.f32 %v952, %v1126
  %v1191 = vmax.f32 %v957, %v1127
  %v1192 = vmax.f32 %v960, %v1128
  %v1193 = vmax.f32 %v965, %v1129
  %v1194 = vmax.f32 %v968, %v1130
  %v1195 = vmax.f32 %v973, %v1131
  %v1196 = vmax.f32 %v976, %v1132
  %v1197 = vmax.f32 %v981, %v1133
  %v1198 = vmax.f32 %v984, %v1134
  %v1199 = vmax.f32 %v989, %v1135
  %v1200 = vmax.f32 %v992, %v1136
  %v1201 = vmax.f32 %v997, %v1137
  %v1202 = vmax.f32 %v1000, %v1138
  %v1203 = vmax.f32 %v1005, %v1139
  %v1204 = vmax.f32 %v1008, %v1140
  %v1205 = vmax.f32 %v1013, %v1141
  %v1206 = vmax.f32 %v1016, %v1142
  %v1207 = vmax.f32 %v1021, %v1143
  %v1208 = vmax.f32 %v1024, %v1144
  %v1209 = vmax.f32 %v1029, %v1145
  %v1210 = vmax.f32 %v1032, %v1146
  %v1211 = vmax.f32 %v1037, %v1147
  %v1212 = vmax.f32 %v1040, %v1148
  %v1213 = vmax.f32 %v1045, %v1149
  %v1214 = vmax.f32 %v1048, %v1150
  %v1215 = vmax.f32 %v1053, %v1151
  %v1216 = vmax.f32 %v1056, %v1152
  %v1217 = vmax.f32 %v1061, %v1153
  %v1218 = vmax.f32 %v1064, %v1154
  %v1219 = vmax.f32 %v1069, %v1155
  %v1220 = vmax.f32 %v1072, %v1156
  %v1221 = vmax.f32 %v1077, %v1157
  %v1222 = vmax.f32 %v1080, %v1158
  %v1223 = vmax.f32 %v1085, %v1159
  %v1224 = vmax.f32 %v1088, %v1160
  %v1225 = vmax.f32 %v1093, %v1161
  %v1226 = vmax.f32 %v1096, %v1162
  %v1227 = vpack.c.bf16 %v1164, %v1163
  %v1228 = vpack.c.bf16 %v1166, %v1165
  %v1229 = vpack.c.bf16 %v1168, %v1167
  %v1230 = vpack.c.bf16 %v1170, %v1169
  %v1231 = vpack.c.bf16 %v1172, %v1171
  %v1232 = vpack.c.bf16 %v1174, %v1173
  %v1233 = vpack.c.bf16 %v1176, %v1175
  %v1234 = vpack.c.bf16 %v1178, %v1177
  %v1235 = vpack.c.bf16 %v1180, %v1179
  %v1236 = vpack.c.bf16 %v1182, %v1181
  %v1237 = vpack.c.bf16 %v1184, %v1183
  %v1238 = vpack.c.bf16 %v1186, %v1185
  %v1239 = vpack.c.bf16 %v1188, %v1187
  %v1240 = vpack.c.bf16 %v1190, %v1189
  %v1241 = vpack.c.bf16 %v1192, %v1191
  %v1242 = vpack.c.bf16 %v1194, %v1193
  %v1243 = vpack.c.bf16 %v1196, %v1195
  %v1244 = vpack.c.bf16 %v1198, %v1197
  %v1245 = vpack.c.bf16 %v1200, %v1199
  %v1246 = vpack.c.bf16 %v1202, %v1201
  %v1247 = vpack.c.bf16 %v1204, %v1203
  %v1248 = vpack.c.bf16 %v1206, %v1205
  %v1249 = vpack.c.bf16 %v1208, %v1207
  %v1250 = vpack.c.bf16 %v1210, %v1209
  %v1251 = vpack.c.bf16 %v1212, %v1211
  %v1252 = vpack.c.bf16 %v1214, %v1213
  %v1253 = vpack.c.bf16 %v1216, %v1215
  %v1254 = vpack.c.bf16 %v1218, %v1217
  %v1255 = vpack.c.bf16 %v1220, %v1219
  %v1256 = vpack.c.bf16 %v1222, %v1221
  %v1257 = vpack.c.bf16 %v1224, %v1223
  %v1258 = vpack.c.bf16 %v1226, %v1225
  %v1259 = vld [vmem:[%s5] sm:$0xf]
  %v1260 = vld [vmem:[%s5 + $0x4] sm:$0xf]
  %v1261 = vld [vmem:[%s5 + $0x8] sm:$0xf]
  %v1262 = vld [vmem:[%s5 + $0xc] sm:$0xf]
  %v1263 = vld [vmem:[%s6] sm:$0x1]
  %v1265 = vlaneseq
  %v1266 = vshrl.u32 %v1265, 7
  %v1267 = vsub.s32 0, %v1266
  %v1268 = vrot.slane %v1263, %v1267
  %v1274 = vunpack.c.l.b16 %v1259
  %v1275 = vunpack.c.l.b16 %v1260
  %v1276 = vunpack.c.l.b16 %v1261
  %v1277 = vunpack.c.l.b16 %v1262
  %v1278 = vpack.c.b16 %v1275, %v1274
  %v1279 = vpack.c.b16 %v1277, %v1276
  %v1283 = vsel %vm713, %v1227, 0
  %v1286 = vsel %vm713, %v1228, 0
  %v1289 = vsel %vm713, %v1229, 0
  %v1292 = vsel %vm713, %v1230, 0
  %v1295 = vsel %vm713, %v1231, 0
  %v1298 = vsel %vm713, %v1232, 0
  %v1301 = vsel %vm713, %v1233, 0
  %v1304 = vsel %vm713, %v1234, 0
  %v1307 = vsel %vm713, %v1235, 0
  %v1310 = vsel %vm713, %v1236, 0
  %v1313 = vsel %vm713, %v1237, 0
  %v1316 = vsel %vm713, %v1238, 0
  %v1319 = vsel %vm713, %v1239, 0
  %v1322 = vsel %vm713, %v1240, 0
  %v1325 = vsel %vm713, %v1241, 0
  %v1328 = vsel %vm713, %v1242, 0
  %v1331 = vsel %vm713, %v1243, 0
  %v1334 = vsel %vm713, %v1244, 0
  %v1337 = vsel %vm713, %v1245, 0
  %v1340 = vsel %vm713, %v1246, 0
  %v1343 = vsel %vm713, %v1247, 0
  %v1346 = vsel %vm713, %v1248, 0
  %v1349 = vsel %vm713, %v1249, 0
  %v1352 = vsel %vm713, %v1250, 0
  %v1355 = vsel %vm713, %v1251, 0
  %v1358 = vsel %vm713, %v1252, 0
  %v1361 = vsel %vm713, %v1253, 0
  %v1364 = vsel %vm713, %v1254, 0
  %v1367 = vsel %vm713, %v1255, 0
  %v1370 = vsel %vm713, %v1256, 0
  %v1373 = vsel %vm713, %v1257, 0
  %v1376 = vsel %vm713, %v1258, 0
  %1378 = vmatprep.subr.bf16.mxu0 0
  %1379 = vmatpush1.bf16.msra.mxu0 %v1278
  %1380 = vmatprep.subr.bf16.mxu0 0
  %1381 = vmatpush1.bf16.msra.mxu0 %v1279
  %1382 = vmatprep.subr.bf16.mxu0 0
  %1383 = vmatpush1.bf16.msra.mxu0 0
  %1384 = vmatprep.subr.bf16.mxu0 0
  %1385 = vmatpush1.bf16.msra.mxu0 0
  %1386 = vmatprep.subr.bf16.mxu0 0
  %1387 = vmatpush1.bf16.msra.mxu0 0
  %1388 = vmatprep.subr.bf16.mxu0 0
  %1389 = vmatpush1.bf16.msra.mxu0 0
  %1390 = vmatprep.subr.bf16.mxu0 0
  %1391 = vmatpush1.bf16.msra.mxu0 0
  %1392 = vmatprep.subr.bf16.mxu0 0
  %1393 = vmatpush1.bf16.msra.mxu0 0
  %1394 = vmatprep.subr.bf16.mxu0 0
  %1395 = vmatpush1.bf16.msra.mxu0 0
  %1396 = vmatprep.subr.bf16.mxu0 0
  %1397 = vmatpush1.bf16.msra.mxu0 0
  %1398 = vmatprep.subr.bf16.mxu0 0
  %1399 = vmatpush1.bf16.msra.mxu0 0
  %1400 = vmatprep.subr.bf16.mxu0 0
  %1401 = vmatpush1.bf16.msra.mxu0 0
  %1402 = vmatprep.subr.bf16.mxu0 0
  %1403 = vmatpush1.bf16.msra.mxu0 0
  %1404 = vmatprep.subr.bf16.mxu0 0
  %1405 = vmatpush1.bf16.msra.mxu0 0
  %1406 = vmatprep.subr.bf16.mxu0 0
  %1407 = vmatpush1.bf16.msra.mxu0 0
  %1408 = vmatprep.subr.bf16.mxu0 0
  %1409 = vmatpush1.bf16.msra.mxu0 0
  %1410 = vmatprep.mubr.bf16.mxu0 0
  %1411 = vmatmul.mubr.bf16.gmra.mrb[0].mxu0 %v1283
  %v1412 = vpop.f32.mrb[0].mxu0
  %v1413 = vadd.f32 %v1268, %v1412
  %v1414 = vpop.f32.mrb[0].mxu0
  %v1415 = vpop.f32.mrb[0].mxu0
  %v1416 = vadd.f32 %v1268, %v1415
  %v1417 = vpop.f32.mrb[0].mxu0
  %1418 = vmatprep.mubr.bf16.mxu0 0
  %1419 = vmatmul.mubr.bf16.gmra.mrb[0].mxu0 %v1286
  %v1420 = vpop.f32.mrb[0].mxu0
  %v1421 = vadd.f32 %v1268, %v1420
  %v1422 = vpop.f32.mrb[0].mxu0
  %v1423 = vpop.f32.mrb[0].mxu0
  %v1424 = vadd.f32 %v1268, %v1423
  %v1425 = vpop.f32.mrb[0].mxu0
  %1426 = vmatprep.mubr.bf16.mxu0 0
  %1427 = vmatmul.mubr.bf16.gmra.mrb[0].mxu0 %v1289
  %v1428 = vpop.f32.mrb[0].mxu0
  %v1429 = vadd.f32 %v1268, %v1428
  %v1430 = vpop.f32.mrb[0].mxu0
  %v1431 = vpop.f32.mrb[0].mxu0
  %v1432 = vadd.f32 %v1268, %v1431
  %v1433 = vpop.f32.mrb[0].mxu0
  %1434 = vmatprep.mubr.bf16.mxu0 0
  %1435 = vmatmul.mubr.bf16.gmra.mrb[0].mxu0 %v1292
  %v1436 = vpop.f32.mrb[0].mxu0
  %v1437 = vadd.f32 %v1268, %v1436
  %v1438 = vpop.f32.mrb[0].mxu0
  %v1439 = vpop.f32.mrb[0].mxu0
  %v1440 = vadd.f32 %v1268, %v1439
  %v1441 = vpop.f32.mrb[0].mxu0
  %1442 = vmatprep.mubr.bf16.mxu0 0
  %1443 = vmatmul.mubr.bf16.gmra.mrb[0].mxu0 %v1295
  %v1444 = vpop.f32.mrb[0].mxu0
  %v1445 = vadd.f32 %v1268, %v1444
  %v1446 = vpop.f32.mrb[0].mxu0
  %v1447 = vpop.f32.mrb[0].mxu0
  %v1448 = vadd.f32 %v1268, %v1447
  %v1449 = vpop.f32.mrb[0].mxu0
  %1450 = vmatprep.mubr.bf16.mxu0 0
  %1451 = vmatmul.mubr.bf16.gmra.mrb[0].mxu0 %v1298
  %v1452 = vpop.f32.mrb[0].mxu0
  %v1453 = vadd.f32 %v1268, %v1452
  %v1454 = vpop.f32.mrb[0].mxu0
  %v1455 = vpop.f32.mrb[0].mxu0
  %v1456 = vadd.f32 %v1268, %v1455
  %v1457 = vpop.f32.mrb[0].mxu0
  %1458 = vmatprep.mubr.bf16.mxu0 0
  %1459 = vmatmul.mubr.bf16.gmra.mrb[0].mxu0 %v1301
  %v1460 = vpop.f32.mrb[0].mxu0
  %v1461 = vadd.f32 %v1268, %v1460
  %v1462 = vpop.f32.mrb[0].mxu0
  %v1463 = vpop.f32.mrb[0].mxu0
  %v1464 = vadd.f32 %v1268, %v1463
  %v1465 = vpop.f32.mrb[0].mxu0
  %1466 = vmatprep.mubr.bf16.mxu0 0
  %1467 = vmatmul.mubr.bf16.gmra.mrb[0].mxu0 %v1304
  %v1468 = vpop.f32.mrb[0].mxu0
  %v1469 = vadd.f32 %v1268, %v1468
  %v1470 = vpop.f32.mrb[0].mxu0
  %v1471 = vpop.f32.mrb[0].mxu0
  %v1472 = vadd.f32 %v1268, %v1471
  %v1473 = vpop.f32.mrb[0].mxu0
  %1474 = vmatprep.mubr.bf16.mxu0 0
  %1475 = vmatmul.mubr.bf16.gmra.mrb[0].mxu0 %v1307
  %v1476 = vpop.f32.mrb[0].mxu0
  %v1477 = vadd.f32 %v1268, %v1476
  %v1478 = vpop.f32.mrb[0].mxu0
  %v1479 = vpop.f32.mrb[0].mxu0
  %v1480 = vadd.f32 %v1268, %v1479
  %v1481 = vpop.f32.mrb[0].mxu0
  %1482 = vmatprep.mubr.bf16.mxu0 0
  %1483 = vmatmul.mubr.bf16.gmra.mrb[0].mxu0 %v1310
  %v1484 = vpop.f32.mrb[0].mxu0
  %v1485 = vadd.f32 %v1268, %v1484
  %v1486 = vpop.f32.mrb[0].mxu0
  %v1487 = vpop.f32.mrb[0].mxu0
  %v1488 = vadd.f32 %v1268, %v1487
  %v1489 = vpop.f32.mrb[0].mxu0
  %1490 = vmatprep.mubr.bf16.mxu0 0
  %1491 = vmatmul.mubr.bf16.gmra.mrb[0].mxu0 %v1313
  %v1492 = vpop.f32.mrb[0].mxu0
  %v1493 = vadd.f32 %v1268, %v1492
  %v1494 = vpop.f32.mrb[0].mxu0
  %v1495 = vpop.f32.mrb[0].mxu0
  %v1496 = vadd.f32 %v1268, %v1495
  %v1497 = vpop.f32.mrb[0].mxu0
  %1498 = vmatprep.mubr.bf16.mxu0 0
  %1499 = vmatmul.mubr.bf16.gmra.mrb[0].mxu0 %v1316
  %v1500 = vpop.f32.mrb[0].mxu0
  %v1501 = vadd.f32 %v1268, %v1500
  %v1502 = vpop.f32.mrb[0].mxu0
  %v1503 = vpop.f32.mrb[0].mxu0
  %v1504 = vadd.f32 %v1268, %v1503
  %v1505 = vpop.f32.mrb[0].mxu0
  %1506 = vmatprep.mubr.bf16.mxu0 0
  %1507 = vmatmul.mubr.bf16.gmra.mrb[0].mxu0 %v1319
  %v1508 = vpop.f32.mrb[0].mxu0
  %v1509 = vadd.f32 %v1268, %v1508
  %v1510 = vpop.f32.mrb[0].mxu0
  %v1511 = vpop.f32.mrb[0].mxu0
  %v1512 = vadd.f32 %v1268, %v1511
  %v1513 = vpop.f32.mrb[0].mxu0
  %1514 = vmatprep.mubr.bf16.mxu0 0
  %1515 = vmatmul.mubr.bf16.gmra.mrb[0].mxu0 %v1322
  %v1516 = vpop.f32.mrb[0].mxu0
  %v1517 = vadd.f32 %v1268, %v1516
  %v1518 = vpop.f32.mrb[0].mxu0
  %v1519 = vpop.f32.mrb[0].mxu0
  %v1520 = vadd.f32 %v1268, %v1519
  %v1521 = vpop.f32.mrb[0].mxu0
  %1522 = vmatprep.mubr.bf16.mxu0 0
  %1523 = vmatmul.mubr.bf16.gmra.mrb[0].mxu0 %v1325
  %v1524 = vpop.f32.mrb[0].mxu0
  %v1525 = vadd.f32 %v1268, %v1524
  %v1526 = vpop.f32.mrb[0].mxu0
  %v1527 = vpop.f32.mrb[0].mxu0
  %v1528 = vadd.f32 %v1268, %v1527
  %v1529 = vpop.f32.mrb[0].mxu0
  %1530 = vmatprep.mubr.bf16.mxu0 0
  %1531 = vmatmul.mubr.bf16.gmra.mrb[0].mxu0 %v1328
  %v1532 = vpop.f32.mrb[0].mxu0
  %v1533 = vadd.f32 %v1268, %v1532
  %v1534 = vpop.f32.mrb[0].mxu0
  %v1535 = vpop.f32.mrb[0].mxu0
  %v1536 = vadd.f32 %v1268, %v1535
  %v1537 = vpop.f32.mrb[0].mxu0
  %1538 = vmatprep.mubr.bf16.mxu0 0
  %1539 = vmatmul.mubr.bf16.gmra.mrb[0].mxu0 %v1331
  %v1540 = vpop.f32.mrb[0].mxu0
  %v1541 = vadd.f32 %v1268, %v1540
  %v1542 = vpop.f32.mrb[0].mxu0
  %v1543 = vpop.f32.mrb[0].mxu0
  %v1544 = vadd.f32 %v1268, %v1543
  %v1545 = vpop.f32.mrb[0].mxu0
  %1546 = vmatprep.mubr.bf16.mxu0 0
  %1547 = vmatmul.mubr.bf16.gmra.mrb[0].mxu0 %v1334
  %v1548 = vpop.f32.mrb[0].mxu0
  %v1549 = vadd.f32 %v1268, %v1548
  %v1550 = vpop.f32.mrb[0].mxu0
  %v1551 = vpop.f32.mrb[0].mxu0
  %v1552 = vadd.f32 %v1268, %v1551
  %v1553 = vpop.f32.mrb[0].mxu0
  %1554 = vmatprep.mubr.bf16.mxu0 0
  %1555 = vmatmul.mubr.bf16.gmra.mrb[0].mxu0 %v1337
  %v1556 = vpop.f32.mrb[0].mxu0
  %v1557 = vadd.f32 %v1268, %v1556
  %v1558 = vpop.f32.mrb[0].mxu0
  %v1559 = vpop.f32.mrb[0].mxu0
  %v1560 = vadd.f32 %v1268, %v1559
  %v1561 = vpop.f32.mrb[0].mxu0
  %1562 = vmatprep.mubr.bf16.mxu0 0
  %1563 = vmatmul.mubr.bf16.gmra.mrb[0].mxu0 %v1340
  %v1564 = vpop.f32.mrb[0].mxu0
  %v1565 = vadd.f32 %v1268, %v1564
  %v1566 = vpop.f32.mrb[0].mxu0
  %v1567 = vpop.f32.mrb[0].mxu0
  %v1568 = vadd.f32 %v1268, %v1567
  %v1569 = vpop.f32.mrb[0].mxu0
  %1570 = vmatprep.mubr.bf16.mxu0 0
  %1571 = vmatmul.mubr.bf16.gmra.mrb[0].mxu0 %v1343
  %v1572 = vpop.f32.mrb[0].mxu0
  %v1573 = vadd.f32 %v1268, %v1572
  %v1574 = vpop.f32.mrb[0].mxu0
  %v1575 = vpop.f32.mrb[0].mxu0
  %v1576 = vadd.f32 %v1268, %v1575
  %v1577 = vpop.f32.mrb[0].mxu0
  %1578 = vmatprep.mubr.bf16.mxu0 0
  %1579 = vmatmul.mubr.bf16.gmra.mrb[0].mxu0 %v1346
  %v1580 = vpop.f32.mrb[0].mxu0
  %v1581 = vadd.f32 %v1268, %v1580
  %v1582 = vpop.f32.mrb[0].mxu0
  %v1583 = vpop.f32.mrb[0].mxu0
  %v1584 = vadd.f32 %v1268, %v1583
  %v1585 = vpop.f32.mrb[0].mxu0
  %1586 = vmatprep.mubr.bf16.mxu0 0
  %1587 = vmatmul.mubr.bf16.gmra.mrb[0].mxu0 %v1349
  %v1588 = vpop.f32.mrb[0].mxu0
  %v1589 = vadd.f32 %v1268, %v1588
  %v1590 = vpop.f32.mrb[0].mxu0
  %v1591 = vpop.f32.mrb[0].mxu0
  %v1592 = vadd.f32 %v1268, %v1591
  %v1593 = vpop.f32.mrb[0].mxu0
  %1594 = vmatprep.mubr.bf16.mxu0 0
  %1595 = vmatmul.mubr.bf16.gmra.mrb[0].mxu0 %v1352
  %v1596 = vpop.f32.mrb[0].mxu0
  %v1597 = vadd.f32 %v1268, %v1596
  %v1598 = vpop.f32.mrb[0].mxu0
  %v1599 = vpop.f32.mrb[0].mxu0
  %v1600 = vadd.f32 %v1268, %v1599
  %v1601 = vpop.f32.mrb[0].mxu0
  %1602 = vmatprep.mubr.bf16.mxu0 0
  %1603 = vmatmul.mubr.bf16.gmra.mrb[0].mxu0 %v1355
  %v1604 = vpop.f32.mrb[0].mxu0
  %v1605 = vadd.f32 %v1268, %v1604
  %v1606 = vpop.f32.mrb[0].mxu0
  %v1607 = vpop.f32.mrb[0].mxu0
  %v1608 = vadd.f32 %v1268, %v1607
  %v1609 = vpop.f32.mrb[0].mxu0
  %1610 = vmatprep.mubr.bf16.mxu0 0
  %1611 = vmatmul.mubr.bf16.gmra.mrb[0].mxu0 %v1358
  %v1612 = vpop.f32.mrb[0].mxu0
  %v1613 = vadd.f32 %v1268, %v1612
  %v1614 = vpop.f32.mrb[0].mxu0
  %v1615 = vpop.f32.mrb[0].mxu0
  %v1616 = vadd.f32 %v1268, %v1615
  %v1617 = vpop.f32.mrb[0].mxu0
  %1618 = vmatprep.mubr.bf16.mxu0 0
  %1619 = vmatmul.mubr.bf16.gmra.mrb[0].mxu0 %v1361
  %v1620 = vpop.f32.mrb[0].mxu0
  %v1621 = vadd.f32 %v1268, %v1620
  %v1622 = vpop.f32.mrb[0].mxu0
  %v1623 = vpop.f32.mrb[0].mxu0
  %v1624 = vadd.f32 %v1268, %v1623
  %v1625 = vpop.f32.mrb[0].mxu0
  %1626 = vmatprep.mubr.bf16.mxu0 0
  %1627 = vmatmul.mubr.bf16.gmra.mrb[0].mxu0 %v1364
  %v1628 = vpop.f32.mrb[0].mxu0
  %v1629 = vadd.f32 %v1268, %v1628
  %v1630 = vpop.f32.mrb[0].mxu0
  %v1631 = vpop.f32.mrb[0].mxu0
  %v1632 = vadd.f32 %v1268, %v1631
  %v1633 = vpop.f32.mrb[0].mxu0
  %1634 = vmatprep.mubr.bf16.mxu0 0
  %1635 = vmatmul.mubr.bf16.gmra.mrb[0].mxu0 %v1367
  %v1636 = vpop.f32.mrb[0].mxu0
  %v1637 = vadd.f32 %v1268, %v1636
  %v1638 = vpop.f32.mrb[0].mxu0
  %v1639 = vpop.f32.mrb[0].mxu0
  %v1640 = vadd.f32 %v1268, %v1639
  %v1641 = vpop.f32.mrb[0].mxu0
  %1642 = vmatprep.mubr.bf16.mxu0 0
  %1643 = vmatmul.mubr.bf16.gmra.mrb[0].mxu0 %v1370
  %v1644 = vpop.f32.mrb[0].mxu0
  %v1645 = vadd.f32 %v1268, %v1644
  %v1646 = vpop.f32.mrb[0].mxu0
  %v1647 = vpop.f32.mrb[0].mxu0
  %v1648 = vadd.f32 %v1268, %v1647
  %v1649 = vpop.f32.mrb[0].mxu0
  %1650 = vmatprep.mubr.bf16.mxu0 0
  %1651 = vmatmul.mubr.bf16.gmra.mrb[0].mxu0 %v1373
  %v1652 = vpop.f32.mrb[0].mxu0
  %v1653 = vadd.f32 %v1268, %v1652
  %v1654 = vpop.f32.mrb[0].mxu0
  %v1655 = vpop.f32.mrb[0].mxu0
  %v1656 = vadd.f32 %v1268, %v1655
  %v1657 = vpop.f32.mrb[0].mxu0
  %1658 = vmatprep.mubr.bf16.mxu0 0
  %1659 = vmatmul.mubr.bf16.gmra.mrb[0].mxu0 %v1376
  %v1660 = vpop.f32.mrb[0].mxu0
  %v1661 = vadd.f32 %v1268, %v1660
  %v1662 = vpop.f32.mrb[0].mxu0
  %v1663 = vpop.f32.mrb[0].mxu0
  %v1664 = vadd.f32 %v1268, %v1663
  %v1665 = vpop.f32.mrb[0].mxu0
  %1666 = vdwg.mxu0
  %v1667 = vmul.f32 %v1413, 0.01
  %v1668 = vmul.f32 %v1416, 0.01
  %v1669 = vmul.f32 %v1421, 0.01
  %v1670 = vmul.f32 %v1424, 0.01
  %v1671 = vmul.f32 %v1429, 0.01
  %v1672 = vmul.f32 %v1432, 0.01
  %v1673 = vmul.f32 %v1437, 0.01
  %v1674 = vmul.f32 %v1440, 0.01
  %v1675 = vmul.f32 %v1445, 0.01
  %v1676 = vmul.f32 %v1448, 0.01
  %v1677 = vmul.f32 %v1453, 0.01
  %v1678 = vmul.f32 %v1456, 0.01
  %v1679 = vmul.f32 %v1461, 0.01
  %v1680 = vmul.f32 %v1464, 0.01
  %v1681 = vmul.f32 %v1469, 0.01
  %v1682 = vmul.f32 %v1472, 0.01
  %v1683 = vmul.f32 %v1477, 0.01
  %v1684 = vmul.f32 %v1480, 0.01
  %v1685 = vmul.f32 %v1485, 0.01
  %v1686 = vmul.f32 %v1488, 0.01
  %v1687 = vmul.f32 %v1493, 0.01
  %v1688 = vmul.f32 %v1496, 0.01
  %v1689 = vmul.f32 %v1501, 0.01
  %v1690 = vmul.f32 %v1504, 0.01
  %v1691 = vmul.f32 %v1509, 0.01
  %v1692 = vmul.f32 %v1512, 0.01
  %v1693 = vmul.f32 %v1517, 0.01
  %v1694 = vmul.f32 %v1520, 0.01
  %v1695 = vmul.f32 %v1525, 0.01
  %v1696 = vmul.f32 %v1528, 0.01
  %v1697 = vmul.f32 %v1533, 0.01
  %v1698 = vmul.f32 %v1536, 0.01
  %v1699 = vmul.f32 %v1541, 0.01
  %v1700 = vmul.f32 %v1544, 0.01
  %v1701 = vmul.f32 %v1549, 0.01
  %v1702 = vmul.f32 %v1552, 0.01
  %v1703 = vmul.f32 %v1557, 0.01
  %v1704 = vmul.f32 %v1560, 0.01
  %v1705 = vmul.f32 %v1565, 0.01
  %v1706 = vmul.f32 %v1568, 0.01
  %v1707 = vmul.f32 %v1573, 0.01
  %v1708 = vmul.f32 %v1576, 0.01
  %v1709 = vmul.f32 %v1581, 0.01
  %v1710 = vmul.f32 %v1584, 0.01
  %v1711 = vmul.f32 %v1589, 0.01
  %v1712 = vmul.f32 %v1592, 0.01
  %v1713 = vmul.f32 %v1597, 0.01
  %v1714 = vmul.f32 %v1600, 0.01
  %v1715 = vmul.f32 %v1605, 0.01
  %v1716 = vmul.f32 %v1608, 0.01
  %v1717 = vmul.f32 %v1613, 0.01
  %v1718 = vmul.f32 %v1616, 0.01
  %v1719 = vmul.f32 %v1621, 0.01
  %v1720 = vmul.f32 %v1624, 0.01
  %v1721 = vmul.f32 %v1629, 0.01
  %v1722 = vmul.f32 %v1632, 0.01
  %v1723 = vmul.f32 %v1637, 0.01
  %v1724 = vmul.f32 %v1640, 0.01
  %v1725 = vmul.f32 %v1645, 0.01
  %v1726 = vmul.f32 %v1648, 0.01
  %v1727 = vmul.f32 %v1653, 0.01
  %v1728 = vmul.f32 %v1656, 0.01
  %v1729 = vmul.f32 %v1661, 0.01
  %v1730 = vmul.f32 %v1664, 0.01
  %v1731 = vmax.f32 %v1413, %v1667
  %v1732 = vmax.f32 %v1416, %v1668
  %v1733 = vmax.f32 %v1421, %v1669
  %v1734 = vmax.f32 %v1424, %v1670
  %v1735 = vmax.f32 %v1429, %v1671
  %v1736 = vmax.f32 %v1432, %v1672
  %v1737 = vmax.f32 %v1437, %v1673
  %v1738 = vmax.f32 %v1440, %v1674
  %v1739 = vmax.f32 %v1445, %v1675
  %v1740 = vmax.f32 %v1448, %v1676
  %v1741 = vmax.f32 %v1453, %v1677
  %v1742 = vmax.f32 %v1456, %v1678
  %v1743 = vmax.f32 %v1461, %v1679
  %v1744 = vmax.f32 %v1464, %v1680
  %v1745 = vmax.f32 %v1469, %v1681
  %v1746 = vmax.f32 %v1472, %v1682
  %v1747 = vmax.f32 %v1477, %v1683
  %v1748 = vmax.f32 %v1480, %v1684
  %v1749 = vmax.f32 %v1485, %v1685
  %v1750 = vmax.f32 %v1488, %v1686
  %v1751 = vmax.f32 %v1493, %v1687
  %v1752 = vmax.f32 %v1496, %v1688
  %v1753 = vmax.f32 %v1501, %v1689
  %v1754 = vmax.f32 %v1504, %v1690
  %v1755 = vmax.f32 %v1509, %v1691
  %v1756 = vmax.f32 %v1512, %v1692
  %v1757 = vmax.f32 %v1517, %v1693
  %v1758 = vmax.f32 %v1520, %v1694
  %v1759 = vmax.f32 %v1525, %v1695
  %v1760 = vmax.f32 %v1528, %v1696
  %v1761 = vmax.f32 %v1533, %v1697
  %v1762 = vmax.f32 %v1536, %v1698
  %v1763 = vmax.f32 %v1541, %v1699
  %v1764 = vmax.f32 %v1544, %v1700
  %v1765 = vmax.f32 %v1549, %v1701
  %v1766 = vmax.f32 %v1552, %v1702
  %v1767 = vmax.f32 %v1557, %v1703
  %v1768 = vmax.f32 %v1560, %v1704
  %v1769 = vmax.f32 %v1565, %v1705
  %v1770 = vmax.f32 %v1568, %v1706
  %v1771 = vmax.f32 %v1573, %v1707
  %v1772 = vmax.f32 %v1576, %v1708
  %v1773 = vmax.f32 %v1581, %v1709
  %v1774 = vmax.f32 %v1584, %v1710
  %v1775 = vmax.f32 %v1589, %v1711
  %v1776 = vmax.f32 %v1592, %v1712
  %v1777 = vmax.f32 %v1597, %v1713
  %v1778 = vmax.f32 %v1600, %v1714
  %v1779 = vmax.f32 %v1605, %v1715
  %v1780 = vmax.f32 %v1608, %v1716
  %v1781 = vmax.f32 %v1613, %v1717
  %v1782 = vmax.f32 %v1616, %v1718
  %v1783 = vmax.f32 %v1621, %v1719
  %v1784 = vmax.f32 %v1624, %v1720
  %v1785 = vmax.f32 %v1629, %v1721
  %v1786 = vmax.f32 %v1632, %v1722
  %v1787 = vmax.f32 %v1637, %v1723
  %v1788 = vmax.f32 %v1640, %v1724
  %v1789 = vmax.f32 %v1645, %v1725
  %v1790 = vmax.f32 %v1648, %v1726
  %v1791 = vmax.f32 %v1653, %v1727
  %v1792 = vmax.f32 %v1656, %v1728
  %v1793 = vmax.f32 %v1661, %v1729
  %v1794 = vmax.f32 %v1664, %v1730
  %v1795 = vpack.c.bf16 %v1732, %v1731
  %v1796 = vpack.c.bf16 %v1734, %v1733
  %v1797 = vpack.c.bf16 %v1736, %v1735
  %v1798 = vpack.c.bf16 %v1738, %v1737
  %v1799 = vpack.c.bf16 %v1740, %v1739
  %v1800 = vpack.c.bf16 %v1742, %v1741
  %v1801 = vpack.c.bf16 %v1744, %v1743
  %v1802 = vpack.c.bf16 %v1746, %v1745
  %v1803 = vpack.c.bf16 %v1748, %v1747
  %v1804 = vpack.c.bf16 %v1750, %v1749
  %v1805 = vpack.c.bf16 %v1752, %v1751
  %v1806 = vpack.c.bf16 %v1754, %v1753
  %v1807 = vpack.c.bf16 %v1756, %v1755
  %v1808 = vpack.c.bf16 %v1758, %v1757
  %v1809 = vpack.c.bf16 %v1760, %v1759
  %v1810 = vpack.c.bf16 %v1762, %v1761
  %v1811 = vpack.c.bf16 %v1764, %v1763
  %v1812 = vpack.c.bf16 %v1766, %v1765
  %v1813 = vpack.c.bf16 %v1768, %v1767
  %v1814 = vpack.c.bf16 %v1770, %v1769
  %v1815 = vpack.c.bf16 %v1772, %v1771
  %v1816 = vpack.c.bf16 %v1774, %v1773
  %v1817 = vpack.c.bf16 %v1776, %v1775
  %v1818 = vpack.c.bf16 %v1778, %v1777
  %v1819 = vpack.c.bf16 %v1780, %v1779
  %v1820 = vpack.c.bf16 %v1782, %v1781
  %v1821 = vpack.c.bf16 %v1784, %v1783
  %v1822 = vpack.c.bf16 %v1786, %v1785
  %v1823 = vpack.c.bf16 %v1788, %v1787
  %v1824 = vpack.c.bf16 %v1790, %v1789
  %v1825 = vpack.c.bf16 %v1792, %v1791
  %v1826 = vpack.c.bf16 %v1794, %v1793
  %v1827 = vld [vmem:[%s7] sm:$0xf]
  %v1828 = vld [vmem:[%s7 + $0x4] sm:$0xf]
  %v1829 = vld [vmem:[%s7 + $0x8] sm:$0xf]
  %v1830 = vld [vmem:[%s7 + $0xc] sm:$0xf]
  %v1831 = vld [vmem:[%s8] sm:$0x1]
  %v1833 = vlaneseq
  %v1834 = vshrl.u32 %v1833, 7
  %v1835 = vsub.s32 0, %v1834
  %v1836 = vrot.slane %v1831, %v1835
  %v1842 = vunpack.c.l.b16 %v1827
  %v1843 = vunpack.c.l.b16 %v1828
  %v1844 = vunpack.c.l.b16 %v1829
  %v1845 = vunpack.c.l.b16 %v1830
  %v1846 = vpack.c.b16 %v1843, %v1842
  %v1847 = vpack.c.b16 %v1845, %v1844
  %v1851 = vsel %vm713, %v1795, 0
  %v1854 = vsel %vm713, %v1796, 0
  %v1857 = vsel %vm713, %v1797, 0
  %v1860 = vsel %vm713, %v1798, 0
  %v1863 = vsel %vm713, %v1799, 0
  %v1866 = vsel %vm713, %v1800, 0
  %v1869 = vsel %vm713, %v1801, 0
  %v1872 = vsel %vm713, %v1802, 0
  %v1875 = vsel %vm713, %v1803, 0
  %v1878 = vsel %vm713, %v1804, 0
  %v1881 = vsel %vm713, %v1805, 0
  %v1884 = vsel %vm713, %v1806, 0
  %v1887 = vsel %vm713, %v1807, 0
  %v1890 = vsel %vm713, %v1808, 0
  %v1893 = vsel %vm713, %v1809, 0
  %v1896 = vsel %vm713, %v1810, 0
  %v1899 = vsel %vm713, %v1811, 0
  %v1902 = vsel %vm713, %v1812, 0
  %v1905 = vsel %vm713, %v1813, 0
  %v1908 = vsel %vm713, %v1814, 0
  %v1911 = vsel %vm713, %v1815, 0
  %v1914 = vsel %vm713, %v1816, 0
  %v1917 = vsel %vm713, %v1817, 0
  %v1920 = vsel %vm713, %v1818, 0
  %v1923 = vsel %vm713, %v1819, 0
  %v1926 = vsel %vm713, %v1820, 0
  %v1929 = vsel %vm713, %v1821, 0
  %v1932 = vsel %vm713, %v1822, 0
  %v1935 = vsel %vm713, %v1823, 0
  %v1938 = vsel %vm713, %v1824, 0
  %v1941 = vsel %vm713, %v1825, 0
  %v1944 = vsel %vm713, %v1826, 0
  %1946 = vmatprep.subr.bf16.mxu0 0
  %1947 = vmatpush1.bf16.msra.mxu0 %v1846
  %1948 = vmatprep.subr.bf16.mxu0 0
  %1949 = vmatpush1.bf16.msra.mxu0 %v1847
  %1950 = vmatprep.subr.bf16.mxu0 0
  %1951 = vmatpush1.bf16.msra.mxu0 0
  %1952 = vmatprep.subr.bf16.mxu0 0
  %1953 = vmatpush1.bf16.msra.mxu0 0
  %1954 = vmatprep.subr.bf16.mxu0 0
  %1955 = vmatpush1.bf16.msra.mxu0 0
  %1956 = vmatprep.subr.bf16.mxu0 0
  %1957 = vmatpush1.bf16.msra.mxu0 0
  %1958 = vmatprep.subr.bf16.mxu0 0
  %1959 = vmatpush1.bf16.msra.mxu0 0
  %1960 = vmatprep.subr.bf16.mxu0 0
  %1961 = vmatpush1.bf16.msra.mxu0 0
  %1962 = vmatprep.subr.bf16.mxu0 0
  %1963 = vmatpush1.bf16.msra.mxu0 0
  %1964 = vmatprep.subr.bf16.mxu0 0
  %1965 = vmatpush1.bf16.msra.mxu0 0
  %1966 = vmatprep.subr.bf16.mxu0 0
  %1967 = vmatpush1.bf16.msra.mxu0 0
  %1968 = vmatprep.subr.bf16.mxu0 0
  %1969 = vmatpush1.bf16.msra.mxu0 0
  %1970 = vmatprep.subr.bf16.mxu0 0
  %1971 = vmatpush1.bf16.msra.mxu0 0
  %1972 = vmatprep.subr.bf16.mxu0 0
  %1973 = vmatpush1.bf16.msra.mxu0 0
  %1974 = vmatprep.subr.bf16.mxu0 0
  %1975 = vmatpush1.bf16.msra.mxu0 0
  %1976 = vmatprep.subr.bf16.mxu0 0
  %1977 = vmatpush1.bf16.msra.mxu0 0
  %1978 = vmatprep.mubr.bf16.mxu0 0
  %1979 = vmatmul.mubr.bf16.gmra.mrb[0].mxu0 %v1851
  %v1980 = vpop.f32.mrb[0].mxu0
  %v1981 = vadd.f32 %v1836, %v1980
  %v1982 = vpop.f32.mrb[0].mxu0
  %v1983 = vpop.f32.mrb[0].mxu0
  %v1984 = vadd.f32 %v1836, %v1983
  %v1985 = vpop.f32.mrb[0].mxu0
  %1986 = vmatprep.mubr.bf16.mxu0 0
  %1987 = vmatmul.mubr.bf16.gmra.mrb[0].mxu0 %v1854
  %v1988 = vpop.f32.mrb[0].mxu0
  %v1989 = vadd.f32 %v1836, %v1988
  %v1990 = vpop.f32.mrb[0].mxu0
  %v1991 = vpop.f32.mrb[0].mxu0
  %v1992 = vadd.f32 %v1836, %v1991
  %v1993 = vpop.f32.mrb[0].mxu0
  %1994 = vmatprep.mubr.bf16.mxu0 0
  %1995 = vmatmul.mubr.bf16.gmra.mrb[0].mxu0 %v1857
  %v1996 = vpop.f32.mrb[0].mxu0
  %v1997 = vadd.f32 %v1836, %v1996
  %v1998 = vpop.f32.mrb[0].mxu0
  %v1999 = vpop.f32.mrb[0].mxu0
  %v2000 = vadd.f32 %v1836, %v1999
  %v2001 = vpop.f32.mrb[0].mxu0
  %2002 = vmatprep.mubr.bf16.mxu0 0
  %2003 = vmatmul.mubr.bf16.gmra.mrb[0].mxu0 %v1860
  %v2004 = vpop.f32.mrb[0].mxu0
  %v2005 = vadd.f32 %v1836, %v2004
  %v2006 = vpop.f32.mrb[0].mxu0
  %v2007 = vpop.f32.mrb[0].mxu0
  %v2008 = vadd.f32 %v1836, %v2007
  %v2009 = vpop.f32.mrb[0].mxu0
  %2010 = vmatprep.mubr.bf16.mxu0 0
  %2011 = vmatmul.mubr.bf16.gmra.mrb[0].mxu0 %v1863
  %v2012 = vpop.f32.mrb[0].mxu0
  %v2013 = vadd.f32 %v1836, %v2012
  %v2014 = vpop.f32.mrb[0].mxu0
  %v2015 = vpop.f32.mrb[0].mxu0
  %v2016 = vadd.f32 %v1836, %v2015
  %v2017 = vpop.f32.mrb[0].mxu0
  %2018 = vmatprep.mubr.bf16.mxu0 0
  %2019 = vmatmul.mubr.bf16.gmra.mrb[0].mxu0 %v1866
  %v2020 = vpop.f32.mrb[0].mxu0
  %v2021 = vadd.f32 %v1836, %v2020
  %v2022 = vpop.f32.mrb[0].mxu0
  %v2023 = vpop.f32.mrb[0].mxu0
  %v2024 = vadd.f32 %v1836, %v2023
  %v2025 = vpop.f32.mrb[0].mxu0
  %2026 = vmatprep.mubr.bf16.mxu0 0
  %2027 = vmatmul.mubr.bf16.gmra.mrb[0].mxu0 %v1869
  %v2028 = vpop.f32.mrb[0].mxu0
  %v2029 = vadd.f32 %v1836, %v2028
  %v2030 = vpop.f32.mrb[0].mxu0
  %v2031 = vpop.f32.mrb[0].mxu0
  %v2032 = vadd.f32 %v1836, %v2031
  %v2033 = vpop.f32.mrb[0].mxu0
  %2034 = vmatprep.mubr.bf16.mxu0 0
  %2035 = vmatmul.mubr.bf16.gmra.mrb[0].mxu0 %v1872
  %v2036 = vpop.f32.mrb[0].mxu0
  %v2037 = vadd.f32 %v1836, %v2036
  %v2038 = vpop.f32.mrb[0].mxu0
  %v2039 = vpop.f32.mrb[0].mxu0
  %v2040 = vadd.f32 %v1836, %v2039
  %v2041 = vpop.f32.mrb[0].mxu0
  %2042 = vmatprep.mubr.bf16.mxu0 0
  %2043 = vmatmul.mubr.bf16.gmra.mrb[0].mxu0 %v1875
  %v2044 = vpop.f32.mrb[0].mxu0
  %v2045 = vadd.f32 %v1836, %v2044
  %v2046 = vpop.f32.mrb[0].mxu0
  %v2047 = vpop.f32.mrb[0].mxu0
  %v2048 = vadd.f32 %v1836, %v2047
  %v2049 = vpop.f32.mrb[0].mxu0
  %2050 = vmatprep.mubr.bf16.mxu0 0
  %2051 = vmatmul.mubr.bf16.gmra.mrb[0].mxu0 %v1878
  %v2052 = vpop.f32.mrb[0].mxu0
  %v2053 = vadd.f32 %v1836, %v2052
  %v2054 = vpop.f32.mrb[0].mxu0
  %v2055 = vpop.f32.mrb[0].mxu0
  %v2056 = vadd.f32 %v1836, %v2055
  %v2057 = vpop.f32.mrb[0].mxu0
  %2058 = vmatprep.mubr.bf16.mxu0 0
  %2059 = vmatmul.mubr.bf16.gmra.mrb[0].mxu0 %v1881
  %v2060 = vpop.f32.mrb[0].mxu0
  %v2061 = vadd.f32 %v1836, %v2060
  %v2062 = vpop.f32.mrb[0].mxu0
  %v2063 = vpop.f32.mrb[0].mxu0
  %v2064 = vadd.f32 %v1836, %v2063
  %v2065 = vpop.f32.mrb[0].mxu0
  %2066 = vmatprep.mubr.bf16.mxu0 0
  %2067 = vmatmul.mubr.bf16.gmra.mrb[0].mxu0 %v1884
  %v2068 = vpop.f32.mrb[0].mxu0
  %v2069 = vadd.f32 %v1836, %v2068
  %v2070 = vpop.f32.mrb[0].mxu0
  %v2071 = vpop.f32.mrb[0].mxu0
  %v2072 = vadd.f32 %v1836, %v2071
  %v2073 = vpop.f32.mrb[0].mxu0
  %2074 = vmatprep.mubr.bf16.mxu0 0
  %2075 = vmatmul.mubr.bf16.gmra.mrb[0].mxu0 %v1887
  %v2076 = vpop.f32.mrb[0].mxu0
  %v2077 = vadd.f32 %v1836, %v2076
  %v2078 = vpop.f32.mrb[0].mxu0
  %v2079 = vpop.f32.mrb[0].mxu0
  %v2080 = vadd.f32 %v1836, %v2079
  %v2081 = vpop.f32.mrb[0].mxu0
  %2082 = vmatprep.mubr.bf16.mxu0 0
  %2083 = vmatmul.mubr.bf16.gmra.mrb[0].mxu0 %v1890
  %v2084 = vpop.f32.mrb[0].mxu0
  %v2085 = vadd.f32 %v1836, %v2084
  %v2086 = vpop.f32.mrb[0].mxu0
  %v2087 = vpop.f32.mrb[0].mxu0
  %v2088 = vadd.f32 %v1836, %v2087
  %v2089 = vpop.f32.mrb[0].mxu0
  %2090 = vmatprep.mubr.bf16.mxu0 0
  %2091 = vmatmul.mubr.bf16.gmra.mrb[0].mxu0 %v1893
  %v2092 = vpop.f32.mrb[0].mxu0
  %v2093 = vadd.f32 %v1836, %v2092
  %v2094 = vpop.f32.mrb[0].mxu0
  %v2095 = vpop.f32.mrb[0].mxu0
  %v2096 = vadd.f32 %v1836, %v2095
  %v2097 = vpop.f32.mrb[0].mxu0
  %2098 = vmatprep.mubr.bf16.mxu0 0
  %2099 = vmatmul.mubr.bf16.gmra.mrb[0].mxu0 %v1896
  %v2100 = vpop.f32.mrb[0].mxu0
  %v2101 = vadd.f32 %v1836, %v2100
  %v2102 = vpop.f32.mrb[0].mxu0
  %v2103 = vpop.f32.mrb[0].mxu0
  %v2104 = vadd.f32 %v1836, %v2103
  %v2105 = vpop.f32.mrb[0].mxu0
  %2106 = vmatprep.mubr.bf16.mxu0 0
  %2107 = vmatmul.mubr.bf16.gmra.mrb[0].mxu0 %v1899
  %v2108 = vpop.f32.mrb[0].mxu0
  %v2109 = vadd.f32 %v1836, %v2108
  %v2110 = vpop.f32.mrb[0].mxu0
  %v2111 = vpop.f32.mrb[0].mxu0
  %v2112 = vadd.f32 %v1836, %v2111
  %v2113 = vpop.f32.mrb[0].mxu0
  %2114 = vmatprep.mubr.bf16.mxu0 0
  %2115 = vmatmul.mubr.bf16.gmra.mrb[0].mxu0 %v1902
  %v2116 = vpop.f32.mrb[0].mxu0
  %v2117 = vadd.f32 %v1836, %v2116
  %v2118 = vpop.f32.mrb[0].mxu0
  %v2119 = vpop.f32.mrb[0].mxu0
  %v2120 = vadd.f32 %v1836, %v2119
  %v2121 = vpop.f32.mrb[0].mxu0
  %2122 = vmatprep.mubr.bf16.mxu0 0
  %2123 = vmatmul.mubr.bf16.gmra.mrb[0].mxu0 %v1905
  %v2124 = vpop.f32.mrb[0].mxu0
  %v2125 = vadd.f32 %v1836, %v2124
  %v2126 = vpop.f32.mrb[0].mxu0
  %v2127 = vpop.f32.mrb[0].mxu0
  %v2128 = vadd.f32 %v1836, %v2127
  %v2129 = vpop.f32.mrb[0].mxu0
  %2130 = vmatprep.mubr.bf16.mxu0 0
  %2131 = vmatmul.mubr.bf16.gmra.mrb[0].mxu0 %v1908
  %v2132 = vpop.f32.mrb[0].mxu0
  %v2133 = vadd.f32 %v1836, %v2132
  %v2134 = vpop.f32.mrb[0].mxu0
  %v2135 = vpop.f32.mrb[0].mxu0
  %v2136 = vadd.f32 %v1836, %v2135
  %v2137 = vpop.f32.mrb[0].mxu0
  %2138 = vmatprep.mubr.bf16.mxu0 0
  %2139 = vmatmul.mubr.bf16.gmra.mrb[0].mxu0 %v1911
  %v2140 = vpop.f32.mrb[0].mxu0
  %v2141 = vadd.f32 %v1836, %v2140
  %v2142 = vpop.f32.mrb[0].mxu0
  %v2143 = vpop.f32.mrb[0].mxu0
  %v2144 = vadd.f32 %v1836, %v2143
  %v2145 = vpop.f32.mrb[0].mxu0
  %2146 = vmatprep.mubr.bf16.mxu0 0
  %2147 = vmatmul.mubr.bf16.gmra.mrb[0].mxu0 %v1914
  %v2148 = vpop.f32.mrb[0].mxu0
  %v2149 = vadd.f32 %v1836, %v2148
  %v2150 = vpop.f32.mrb[0].mxu0
  %v2151 = vpop.f32.mrb[0].mxu0
  %v2152 = vadd.f32 %v1836, %v2151
  %v2153 = vpop.f32.mrb[0].mxu0
  %2154 = vmatprep.mubr.bf16.mxu0 0
  %2155 = vmatmul.mubr.bf16.gmra.mrb[0].mxu0 %v1917
  %v2156 = vpop.f32.mrb[0].mxu0
  %v2157 = vadd.f32 %v1836, %v2156
  %v2158 = vpop.f32.mrb[0].mxu0
  %v2159 = vpop.f32.mrb[0].mxu0
  %v2160 = vadd.f32 %v1836, %v2159
  %v2161 = vpop.f32.mrb[0].mxu0
  %2162 = vmatprep.mubr.bf16.mxu0 0
  %2163 = vmatmul.mubr.bf16.gmra.mrb[0].mxu0 %v1920
  %v2164 = vpop.f32.mrb[0].mxu0
  %v2165 = vadd.f32 %v1836, %v2164
  %v2166 = vpop.f32.mrb[0].mxu0
  %v2167 = vpop.f32.mrb[0].mxu0
  %v2168 = vadd.f32 %v1836, %v2167
  %v2169 = vpop.f32.mrb[0].mxu0
  %2170 = vmatprep.mubr.bf16.mxu0 0
  %2171 = vmatmul.mubr.bf16.gmra.mrb[0].mxu0 %v1923
  %v2172 = vpop.f32.mrb[0].mxu0
  %v2173 = vadd.f32 %v1836, %v2172
  %v2174 = vpop.f32.mrb[0].mxu0
  %v2175 = vpop.f32.mrb[0].mxu0
  %v2176 = vadd.f32 %v1836, %v2175
  %v2177 = vpop.f32.mrb[0].mxu0
  %2178 = vmatprep.mubr.bf16.mxu0 0
  %2179 = vmatmul.mubr.bf16.gmra.mrb[0].mxu0 %v1926
  %v2180 = vpop.f32.mrb[0].mxu0
  %v2181 = vadd.f32 %v1836, %v2180
  %v2182 = vpop.f32.mrb[0].mxu0
  %v2183 = vpop.f32.mrb[0].mxu0
  %v2184 = vadd.f32 %v1836, %v2183
  %v2185 = vpop.f32.mrb[0].mxu0
  %2186 = vmatprep.mubr.bf16.mxu0 0
  %2187 = vmatmul.mubr.bf16.gmra.mrb[0].mxu0 %v1929
  %v2188 = vpop.f32.mrb[0].mxu0
  %v2189 = vadd.f32 %v1836, %v2188
  %v2190 = vpop.f32.mrb[0].mxu0
  %v2191 = vpop.f32.mrb[0].mxu0
  %v2192 = vadd.f32 %v1836, %v2191
  %v2193 = vpop.f32.mrb[0].mxu0
  %2194 = vmatprep.mubr.bf16.mxu0 0
  %2195 = vmatmul.mubr.bf16.gmra.mrb[0].mxu0 %v1932
  %v2196 = vpop.f32.mrb[0].mxu0
  %v2197 = vadd.f32 %v1836, %v2196
  %v2198 = vpop.f32.mrb[0].mxu0
  %v2199 = vpop.f32.mrb[0].mxu0
  %v2200 = vadd.f32 %v1836, %v2199
  %v2201 = vpop.f32.mrb[0].mxu0
  %2202 = vmatprep.mubr.bf16.mxu0 0
  %2203 = vmatmul.mubr.bf16.gmra.mrb[0].mxu0 %v1935
  %v2204 = vpop.f32.mrb[0].mxu0
  %v2205 = vadd.f32 %v1836, %v2204
  %v2206 = vpop.f32.mrb[0].mxu0
  %v2207 = vpop.f32.mrb[0].mxu0
  %v2208 = vadd.f32 %v1836, %v2207
  %v2209 = vpop.f32.mrb[0].mxu0
  %2210 = vmatprep.mubr.bf16.mxu0 0
  %2211 = vmatmul.mubr.bf16.gmra.mrb[0].mxu0 %v1938
  %v2212 = vpop.f32.mrb[0].mxu0
  %v2213 = vadd.f32 %v1836, %v2212
  %v2214 = vpop.f32.mrb[0].mxu0
  %v2215 = vpop.f32.mrb[0].mxu0
  %v2216 = vadd.f32 %v1836, %v2215
  %v2217 = vpop.f32.mrb[0].mxu0
  %2218 = vmatprep.mubr.bf16.mxu0 0
  %2219 = vmatmul.mubr.bf16.gmra.mrb[0].mxu0 %v1941
  %v2220 = vpop.f32.mrb[0].mxu0
  %v2221 = vadd.f32 %v1836, %v2220
  %v2222 = vpop.f32.mrb[0].mxu0
  %v2223 = vpop.f32.mrb[0].mxu0
  %v2224 = vadd.f32 %v1836, %v2223
  %v2225 = vpop.f32.mrb[0].mxu0
  %2226 = vmatprep.mubr.bf16.mxu0 0
  %2227 = vmatmul.mubr.bf16.gmra.mrb[0].mxu0 %v1944
  %v2228 = vpop.f32.mrb[0].mxu0
  %v2229 = vadd.f32 %v1836, %v2228
  %v2230 = vpop.f32.mrb[0].mxu0
  %v2231 = vpop.f32.mrb[0].mxu0
  %v2232 = vadd.f32 %v1836, %v2231
  %v2233 = vpop.f32.mrb[0].mxu0
  %2234 = vdwg.mxu0
  %vm2235 = vcmask 64512
  %2236 = vst.msk [vmem:[%s9] sm:$0xff] %vm2235, %v1981
  %2237 = vst.msk [vmem:[%s9 + $0x8] sm:$0xff] %vm2235, %v1984
  %2238 = vst.msk [vmem:[%s9 + $0x10] sm:$0xff] %vm2235, %v1989
  %2239 = vst.msk [vmem:[%s9 + $0x18] sm:$0xff] %vm2235, %v1992
  %2240 = vst.msk [vmem:[%s9 + $0x20] sm:$0xff] %vm2235, %v1997
  %2241 = vst.msk [vmem:[%s9 + $0x28] sm:$0xff] %vm2235, %v2000
  %2242 = vst.msk [vmem:[%s9 + $0x30] sm:$0xff] %vm2235, %v2005
  %2243 = vst.msk [vmem:[%s9 + $0x38] sm:$0xff] %vm2235, %v2008
  %2244 = vst.msk [vmem:[%s9 + $0x40] sm:$0xff] %vm2235, %v2013
  %2245 = vst.msk [vmem:[%s9 + $0x48] sm:$0xff] %vm2235, %v2016
  %2246 = vst.msk [vmem:[%s9 + $0x50] sm:$0xff] %vm2235, %v2021
  %2247 = vst.msk [vmem:[%s9 + $0x58] sm:$0xff] %vm2235, %v2024
  %2248 = vst.msk [vmem:[%s9 + $0x60] sm:$0xff] %vm2235, %v2029
  %2249 = vst.msk [vmem:[%s9 + $0x68] sm:$0xff] %vm2235, %v2032
  %2250 = vst.msk [vmem:[%s9 + $0x70] sm:$0xff] %vm2235, %v2037
  %2251 = vst.msk [vmem:[%s9 + $0x78] sm:$0xff] %vm2235, %v2040
  %2252 = vst.msk [vmem:[%s9 + $0x80] sm:$0xff] %vm2235, %v2045
  %2253 = vst.msk [vmem:[%s9 + $0x88] sm:$0xff] %vm2235, %v2048
  %2254 = vst.msk [vmem:[%s9 + $0x90] sm:$0xff] %vm2235, %v2053
  %2255 = vst.msk [vmem:[%s9 + $0x98] sm:$0xff] %vm2235, %v2056
  %2256 = vst.msk [vmem:[%s9 + $0xa0] sm:$0xff] %vm2235, %v2061
  %2257 = vst.msk [vmem:[%s9 + $0xa8] sm:$0xff] %vm2235, %v2064
  %2258 = vst.msk [vmem:[%s9 + $0xb0] sm:$0xff] %vm2235, %v2069
  %2259 = vst.msk [vmem:[%s9 + $0xb8] sm:$0xff] %vm2235, %v2072
  %2260 = vst.msk [vmem:[%s9 + $0xc0] sm:$0xff] %vm2235, %v2077
  %2261 = vst.msk [vmem:[%s9 + $0xc8] sm:$0xff] %vm2235, %v2080
  %2262 = vst.msk [vmem:[%s9 + $0xd0] sm:$0xff] %vm2235, %v2085
  %2263 = vst.msk [vmem:[%s9 + $0xd8] sm:$0xff] %vm2235, %v2088
  %2264 = vst.msk [vmem:[%s9 + $0xe0] sm:$0xff] %vm2235, %v2093
  %2265 = vst.msk [vmem:[%s9 + $0xe8] sm:$0xff] %vm2235, %v2096
  %2266 = vst.msk [vmem:[%s9 + $0xf0] sm:$0xff] %vm2235, %v2101
  %2267 = vst.msk [vmem:[%s9 + $0xf8] sm:$0xff] %vm2235, %v2104
  %2268 = vst.msk [vmem:[%s9 + $0x100] sm:$0xff] %vm2235, %v2109
  %2269 = vst.msk [vmem:[%s9 + $0x108] sm:$0xff] %vm2235, %v2112
  %2270 = vst.msk [vmem:[%s9 + $0x110] sm:$0xff] %vm2235, %v2117
  %2271 = vst.msk [vmem:[%s9 + $0x118] sm:$0xff] %vm2235, %v2120
  %2272 = vst.msk [vmem:[%s9 + $0x120] sm:$0xff] %vm2235, %v2125
  %2273 = vst.msk [vmem:[%s9 + $0x128] sm:$0xff] %vm2235, %v2128
  %2274 = vst.msk [vmem:[%s9 + $0x130] sm:$0xff] %vm2235, %v2133
  %2275 = vst.msk [vmem:[%s9 + $0x138] sm:$0xff] %vm2235, %v2136
  %2276 = vst.msk [vmem:[%s9 + $0x140] sm:$0xff] %vm2235, %v2141
  %2277 = vst.msk [vmem:[%s9 + $0x148] sm:$0xff] %vm2235, %v2144
  %2278 = vst.msk [vmem:[%s9 + $0x150] sm:$0xff] %vm2235, %v2149
  %2279 = vst.msk [vmem:[%s9 + $0x158] sm:$0xff] %vm2235, %v2152
  %2280 = vst.msk [vmem:[%s9 + $0x160] sm:$0xff] %vm2235, %v2157
  %2281 = vst.msk [vmem:[%s9 + $0x168] sm:$0xff] %vm2235, %v2160
  %2282 = vst.msk [vmem:[%s9 + $0x170] sm:$0xff] %vm2235, %v2165
  %2283 = vst.msk [vmem:[%s9 + $0x178] sm:$0xff] %vm2235, %v2168
  %2284 = vst.msk [vmem:[%s9 + $0x180] sm:$0xff] %vm2235, %v2173
  %2285 = vst.msk [vmem:[%s9 + $0x188] sm:$0xff] %vm2235, %v2176
  %2286 = vst.msk [vmem:[%s9 + $0x190] sm:$0xff] %vm2235, %v2181
  %2287 = vst.msk [vmem:[%s9 + $0x198] sm:$0xff] %vm2235, %v2184
  %2288 = vst.msk [vmem:[%s9 + $0x1a0] sm:$0xff] %vm2235, %v2189
  %2289 = vst.msk [vmem:[%s9 + $0x1a8] sm:$0xff] %vm2235, %v2192
  %2290 = vst.msk [vmem:[%s9 + $0x1b0] sm:$0xff] %vm2235, %v2197
  %2291 = vst.msk [vmem:[%s9 + $0x1b8] sm:$0xff] %vm2235, %v2200
  %2292 = vst.msk [vmem:[%s9 + $0x1c0] sm:$0xff] %vm2235, %v2205
  %2293 = vst.msk [vmem:[%s9 + $0x1c8] sm:$0xff] %vm2235, %v2208
  %2294 = vst.msk [vmem:[%s9 + $0x1d0] sm:$0xff] %vm2235, %v2213
  %2295 = vst.msk [vmem:[%s9 + $0x1d8] sm:$0xff] %vm2235, %v2216
  %2296 = vst.msk [vmem:[%s9 + $0x1e0] sm:$0xff] %vm2235, %v2221
  %2297 = vst.msk [vmem:[%s9 + $0x1e8] sm:$0xff] %vm2235, %v2224
  %2298 = vst.msk [vmem:[%s9 + $0x1f0] sm:$0xff] %vm2235, %v2229
  %2299 = vst.msk [vmem:[%s9 + $0x1f8] sm:$0xff] %vm2235, %v2232
  // Predicated region
  $region38: #{tpu_custom_call.1} parent=0 // pred_check
    _
  $region39: #{tpu_custom_call.1} parent=0 // pred_check_branch
    %2301 = sbr.rel (0) target = $region41
  $region40: #{tpu_custom_call.1} parent=0 // pred_region
    _
  $region41: #{tpu_custom_call.1} parent=0 // pred_fallthru
    _
  // Predicated region
  $region42: #{tpu_custom_call.1} parent=0 // pred_check
    _
  $region43: #{tpu_custom_call.1} parent=0 // pred_check_branch
    %2303 = sbr.rel (0) target = $region45
  $region44: #{tpu_custom_call.1} parent=0 // pred_region
    _
  $region45: #{tpu_custom_call.1} parent=0 // pred_fallthru
    _

</llo_original>
